<compile_context>
chip_gen: v6e
topology: v6e:2x2x1
jax: 0.10.0
libtpu: 0.0.40
codegen_flags: <defaults>
</compile_context>

<pallas_src>
import functools

import jax
import jax.numpy as jnp
from jax.experimental import pallas as pl
from jax.experimental.pallas import tpu as pltpu

_N_LAYERS = 8  # 4 encoder + 4 decoder Linear layers


def _round_up(n, m):
    return pl.cdiv(n, m) * m


def _aeprob_kernel(x_ref, *refs):
    """refs = 16 packed param refs (w0,b0,...,w7,b7), then (xhat_ref, z_ref).

    x_ref:   bf16 [tb/p, p*dim]   (p batch rows packed per slab row)
    weights: bf16 [p*in, p*out]   block-diagonal diag(W,...,W)
    biases:  f32  [1, p*out]      bias tiled p times
    Outputs are f32 in the same packed layout; the wrapper reshapes back.
    """
    param_refs = refs[: 2 * _N_LAYERS]
    xhat_ref, z_ref = refs[2 * _N_LAYERS], refs[2 * _N_LAYERS + 1]

    h = x_ref[...]                                    # bf16, lane-dense

    # ---- encoder: 3x (Linear + ReLU), then Linear to emb_dim ----
    a = None
    for i in range(4):
        w = param_refs[2 * i][...]                    # bf16 [p*in, p*out]
        b = param_refs[2 * i + 1][...]                # f32  [1, p*out]
        a = jnp.dot(h, w, preferred_element_type=jnp.float32) + b
        if i < 3:
            a = jnp.maximum(a, 0.0)                   # ReLU (VPU)
        h = a.astype(jnp.bfloat16)                    # bf16 carry between layers
    z_ref[...] = a                                    # f32 store, p*emb lanes

    # ---- decoder: 3x (Linear + ReLU), then Linear back to dim ----
    for i in range(4):
        w = param_refs[8 + 2 * i][...]
        b = param_refs[8 + 2 * i + 1][...]
        a = jnp.dot(h, w, preferred_element_type=jnp.float32) + b
        if i < 3:
            a = jnp.maximum(a, 0.0)
        h = a.astype(jnp.bfloat16)
    xhat_ref[...] = a                                 # f32 store, p*dim lanes


def init_aeprob_params(key, dim, emb_dim, layer_widths=(64, 64, 64)):
    """Deterministic parameter init (shapes mirror the PyTorch module)."""
    widths = list(layer_widths)
    enc_dims = [dim] + widths + [emb_dim]
    dec_dims = [emb_dim] + widths[::-1] + [dim]

    params = []
    for dims in (enc_dims, dec_dims):
        for fan_in, fan_out in zip(dims[:-1], dims[1:]):
            key, kw, kb = jax.random.split(key, 3)
            scale = 1.0 / jnp.sqrt(jnp.float32(fan_in))
            w = jax.random.uniform(kw, (fan_in, fan_out), jnp.float32,
                                   minval=-scale, maxval=scale)
            b = jax.random.uniform(kb, (1, fan_out), jnp.float32,
                                   minval=-scale, maxval=scale)
            params.extend([w, b])
    return params  # 16 arrays: enc w0,b0..w3,b3, dec w0,b0..w3,b3


def prepare_aeprob_params(params, pack):
    """One-time (outside jit) packing: block-diag bf16 weights, tiled biases."""
    p = int(pack)
    eye = jnp.eye(p, dtype=jnp.float32)
    prepared = []
    for i in range(_N_LAYERS):
        w, b = params[2 * i], params[2 * i + 1]
        w_packed = jnp.kron(eye, w.astype(jnp.float32)).astype(jnp.bfloat16)
        b_tiled = jnp.tile(b.astype(jnp.float32).reshape(1, -1), (1, p))
        prepared.extend([w_packed, b_tiled])
    return prepared


@functools.partial(jax.jit,
                   static_argnames=("dim", "emb_dim", "pack", "tile_b"))
def aeprob_forward(x, kern_params, *, dim, emb_dim, pack=4, tile_b=2048):
    """Returns [x_hat [B, dim], z [B, emb_dim]] — matches AEProb.forward."""
    B = x.shape[0]
    p = int(pack)
    assert kern_params[0].shape[0] == p * dim, "params not prepared for pack/dim"
    row_align = 8 * p  # packed sublane dim (tb/p) must be a multiple of 8

    # Batch tile: large for MXU occupancy / pipelining, but clamped so the
    # grid has >=2 steps (otherwise the "parallel" axis can't be sharded
    # across v7x's two TensorCores).  Per-row VMEM cost is ~1 KiB, so even
    # 2048-4096 rows fit well under the scoped VMEM limit on any generation.
    tb = min(int(tile_b), int(_round_up(pl.cdiv(B, 2), row_align)))
    tb = max(row_align, int(_round_up(tb, row_align)))
    B_pad = int(_round_up(B, tb))

    # bf16 input: halves the streamed x-tile DMA and feeds the MXU directly.
    x = x.astype(jnp.bfloat16)
    if B_pad != B:
        x = jnp.pad(x, ((0, B_pad - B), (0, 0)))
    # Pack p batch rows per slab row (free row-major view) -> lane-dense.
    x_packed = x.reshape(B_pad // p, p * dim)

    grid = (B_pad // tb,)
    tb_p = tb // p

    # Input tile streams over the batch; params get constant index_maps so
    # they are DMA'd once and stay resident in VMEM across grid steps.
    in_specs = [pl.BlockSpec((tb_p, p * dim), lambda i: (i, 0))]
    for kp in kern_params:
        in_specs.append(pl.BlockSpec(kp.shape, lambda i: (0, 0)))
    out_specs = (
        pl.BlockSpec((tb_p, p * dim), lambda i: (i, 0)),       # x_hat (packed)
        pl.BlockSpec((tb_p, p * emb_dim), lambda i: (i, 0)),   # z     (packed)
    )
    out_shape = (
        jax.ShapeDtypeStruct((B_pad // p, p * dim), jnp.float32),
        jax.ShapeDtypeStruct((B_pad // p, p * emb_dim), jnp.float32),
    )

    flops = 0
    param_bytes = 0
    for i in range(_N_LAYERS):
        w = kern_params[2 * i]
        flops += 2 * w.shape[0] * w.shape[1] * (B_pad // p)
        param_bytes += w.size * w.dtype.itemsize
        param_bytes += kern_params[2 * i + 1].size * 4
    cost = pl.CostEstimate(
        flops=flops,
        transcendentals=0,
        bytes_accessed=(B_pad * dim * 2                 # bf16 x in
                        + B_pad * (dim + emb_dim) * 4   # f32 x_hat, z out
                        + param_bytes),
    )

    xhat_p, z_p = pl.pallas_call(
        _aeprob_kernel,
        out_shape=out_shape,
        grid=grid,
        in_specs=in_specs,
        out_specs=out_specs,
        compiler_params=pltpu.CompilerParams(
            dimension_semantics=("parallel",)),
        cost_estimate=cost,
    )(x_packed, *kern_params)

    # Unpack (free row-major views) and drop padding rows.
    x_hat = xhat_p.reshape(B_pad, dim)[:B]
    z = z_p.reshape(B_pad, emb_dim)[:B]
    return [x_hat, z]


def _reference_forward(x, params):
    """Pure-JAX f32 reference of the same computation (correctness check)."""
    h = x
    for i in range(4):
        w, b = params[2 * i], params[2 * i + 1]
        h = h @ w + b
        if i < 3:
            h = jnp.maximum(h, 0.0)
    z = h
    for i in range(4):
        w, b = params[8 + 2 * i], params[8 + 2 * i + 1]
        h = h @ w + b
        if i < 3:
            h = jnp.maximum(h, 0.0)
    return h, z


if __name__ == "__main__":
    # Small shapes consistent with the module; B deliberately NOT a multiple
    # of the batch tile to exercise the padding path + a multi-step grid.
    B, DIM, EMB = 200, 16, 8
    PACK, TILE_B = 4, 64   # small tile for the test; production default 2048

    key = jax.random.PRNGKey(0)
    kx, kp = jax.random.split(key)
    x = jax.random.normal(kx, (B, DIM), dtype=jnp.float32)
    params = init_aeprob_params(kp, DIM, EMB)
    kern_params = prepare_aeprob_params(params, PACK)   # once, outside jit

    x_hat, z = aeprob_forward(x, kern_params, dim=DIM, emb_dim=EMB,
                              pack=PACK, tile_b=TILE_B)
    jax.block_until_ready((x_hat, z))

    # Sanity check vs pure-JAX f32 reference (bf16 matmul path -> loose tol).
    x_hat_ref, z_ref = _reference_forward(x, params)
    assert x_hat.shape == (B, DIM) and z.shape == (B, EMB)
    assert jnp.allclose(x_hat, x_hat_ref, atol=3e-2, rtol=3e-2), (
        float(jnp.max(jnp.abs(x_hat - x_hat_ref))))
    assert jnp.allclose(z, z_ref, atol=3e-2, rtol=3e-2), (
        float(jnp.max(jnp.abs(z - z_ref))))

    print("KERNEL_OK")
</pallas_src>

<mosaic_0001>
module attributes {stable_mosaic.version = 11 : i64} {
  func.func @_aeprob_kernel(%arg0: i32, %arg1: memref<16x64xbf16, #tpu.memory_space<vmem>>, %arg2: memref<64x256xbf16, #tpu.memory_space<vmem>>, %arg3: memref<1x256xf32, #tpu.memory_space<vmem>>, %arg4: memref<256x256xbf16, #tpu.memory_space<vmem>>, %arg5: memref<1x256xf32, #tpu.memory_space<vmem>>, %arg6: memref<256x256xbf16, #tpu.memory_space<vmem>>, %arg7: memref<1x256xf32, #tpu.memory_space<vmem>>, %arg8: memref<256x32xbf16, #tpu.memory_space<vmem>>, %arg9: memref<1x32xf32, #tpu.memory_space<vmem>>, %arg10: memref<32x256xbf16, #tpu.memory_space<vmem>>, %arg11: memref<1x256xf32, #tpu.memory_space<vmem>>, %arg12: memref<256x256xbf16, #tpu.memory_space<vmem>>, %arg13: memref<1x256xf32, #tpu.memory_space<vmem>>, %arg14: memref<256x256xbf16, #tpu.memory_space<vmem>>, %arg15: memref<1x256xf32, #tpu.memory_space<vmem>>, %arg16: memref<256x64xbf16, #tpu.memory_space<vmem>>, %arg17: memref<1x64xf32, #tpu.memory_space<vmem>>, %arg18: memref<16x64xf32, #tpu.memory_space<vmem>>, %arg19: memref<16x32xf32, #tpu.memory_space<vmem>>) attributes {dimension_semantics = [#tpu.dimension_semantics<parallel>], iteration_bounds = array<i64: 4>, scalar_prefetch = 0 : i64, scratch_operands = 0 : i64, tpu.core_type = #tpu.core_type<tc>, window_params = [{transform_indices = @transform_0, window_bounds = array<i64: 16, 64>}, {pipeline_mode = #tpu.pipeline_mode<synchronous>, transform_indices = @transform_1, window_bounds = array<i64: 64, 256>}, {pipeline_mode = #tpu.pipeline_mode<synchronous>, transform_indices = @transform_2, window_bounds = array<i64: 1, 256>}, {pipeline_mode = #tpu.pipeline_mode<synchronous>, transform_indices = @transform_3, window_bounds = array<i64: 256, 256>}, {pipeline_mode = #tpu.pipeline_mode<synchronous>, transform_indices = @transform_4, window_bounds = array<i64: 1, 256>}, {pipeline_mode = #tpu.pipeline_mode<synchronous>, transform_indices = @transform_5, window_bounds = array<i64: 256, 256>}, {pipeline_mode = #tpu.pipeline_mode<synchronous>, transform_indices = @transform_6, window_bounds = array<i64: 1, 256>}, {pipeline_mode = #tpu.pipeline_mode<synchronous>, transform_indices = @transform_7, window_bounds = array<i64: 256, 32>}, {pipeline_mode = #tpu.pipeline_mode<synchronous>, transform_indices = @transform_8, window_bounds = array<i64: 1, 32>}, {pipeline_mode = #tpu.pipeline_mode<synchronous>, transform_indices = @transform_9, window_bounds = array<i64: 32, 256>}, {pipeline_mode = #tpu.pipeline_mode<synchronous>, transform_indices = @transform_10, window_bounds = array<i64: 1, 256>}, {pipeline_mode = #tpu.pipeline_mode<synchronous>, transform_indices = @transform_11, window_bounds = array<i64: 256, 256>}, {pipeline_mode = #tpu.pipeline_mode<synchronous>, transform_indices = @transform_12, window_bounds = array<i64: 1, 256>}, {pipeline_mode = #tpu.pipeline_mode<synchronous>, transform_indices = @transform_13, window_bounds = array<i64: 256, 256>}, {pipeline_mode = #tpu.pipeline_mode<synchronous>, transform_indices = @transform_14, window_bounds = array<i64: 1, 256>}, {pipeline_mode = #tpu.pipeline_mode<synchronous>, transform_indices = @transform_15, window_bounds = array<i64: 256, 64>}, {pipeline_mode = #tpu.pipeline_mode<synchronous>, transform_indices = @transform_16, window_bounds = array<i64: 1, 64>}, {transform_indices = @transform_17, window_bounds = array<i64: 16, 64>}, {transform_indices = @transform_18, window_bounds = array<i64: 16, 32>}]} {
    %c0 = arith.constant 0 : index
    %c0_0 = arith.constant 0 : index
    %0 = vector.load %arg1[%c0, %c0_0] : memref<16x64xbf16, #tpu.memory_space<vmem>>, vector<16x64xbf16>
    %c0_1 = arith.constant 0 : index
    %c0_2 = arith.constant 0 : index
    %1 = vector.load %arg2[%c0_1, %c0_2] : memref<64x256xbf16, #tpu.memory_space<vmem>>, vector<64x256xbf16>
    %c0_3 = arith.constant 0 : index
    %c0_4 = arith.constant 0 : index
    %2 = vector.load %arg3[%c0_3, %c0_4] : memref<1x256xf32, #tpu.memory_space<vmem>>, vector<1x256xf32>
    %cst = arith.constant dense<0.000000e+00> : vector<16x256xf32>
    %3 = tpu.matmul %0, %1, %cst {dimension_numbers = #tpu.dot_dimension_numbers<[1], [0], [0], [1], [0, 0, 1, 1], [], []>} : vector<16x64xbf16>, vector<64x256xbf16>, vector<16x256xf32> -> vector<16x256xf32>
    %4 = vector.broadcast %2 : vector<1x256xf32> to vector<16x256xf32>
    %5 = arith.addf %3, %4 : vector<16x256xf32>
    %cst_5 = arith.constant 0.000000e+00 : f32
    %6 = vector.broadcast %cst_5 : f32 to vector<16x256xf32>
    %7 = arith.maximumf %5, %6 : vector<16x256xf32>
    %8 = arith.truncf %7 : vector<16x256xf32> to vector<16x256xbf16>
    %c0_6 = arith.constant 0 : index
    %c0_7 = arith.constant 0 : index
    %9 = vector.load %arg4[%c0_6, %c0_7] : memref<256x256xbf16, #tpu.memory_space<vmem>>, vector<256x256xbf16>
    %c0_8 = arith.constant 0 : index
    %c0_9 = arith.constant 0 : index
    %10 = vector.load %arg5[%c0_8, %c0_9] : memref<1x256xf32, #tpu.memory_space<vmem>>, vector<1x256xf32>
    %cst_10 = arith.constant dense<0.000000e+00> : vector<16x256xf32>
    %11 = tpu.matmul %8, %9, %cst_10 {dimension_numbers = #tpu.dot_dimension_numbers<[1], [0], [0], [1], [0, 0, 1, 1], [], []>} : vector<16x256xbf16>, vector<256x256xbf16>, vector<16x256xf32> -> vector<16x256xf32>
    %12 = vector.broadcast %10 : vector<1x256xf32> to vector<16x256xf32>
    %13 = arith.addf %11, %12 : vector<16x256xf32>
    %cst_11 = arith.constant 0.000000e+00 : f32
    %14 = vector.broadcast %cst_11 : f32 to vector<16x256xf32>
    %15 = arith.maximumf %13, %14 : vector<16x256xf32>
    %16 = arith.truncf %15 : vector<16x256xf32> to vector<16x256xbf16>
    %c0_12 = arith.constant 0 : index
    %c0_13 = arith.constant 0 : index
    %17 = vector.load %arg6[%c0_12, %c0_13] : memref<256x256xbf16, #tpu.memory_space<vmem>>, vector<256x256xbf16>
    %c0_14 = arith.constant 0 : index
    %c0_15 = arith.constant 0 : index
    %18 = vector.load %arg7[%c0_14, %c0_15] : memref<1x256xf32, #tpu.memory_space<vmem>>, vector<1x256xf32>
    %cst_16 = arith.constant dense<0.000000e+00> : vector<16x256xf32>
    %19 = tpu.matmul %16, %17, %cst_16 {dimension_numbers = #tpu.dot_dimension_numbers<[1], [0], [0], [1], [0, 0, 1, 1], [], []>} : vector<16x256xbf16>, vector<256x256xbf16>, vector<16x256xf32> -> vector<16x256xf32>
    %20 = vector.broadcast %18 : vector<1x256xf32> to vector<16x256xf32>
    %21 = arith.addf %19, %20 : vector<16x256xf32>
    %cst_17 = arith.constant 0.000000e+00 : f32
    %22 = vector.broadcast %cst_17 : f32 to vector<16x256xf32>
    %23 = arith.maximumf %21, %22 : vector<16x256xf32>
    %24 = arith.truncf %23 : vector<16x256xf32> to vector<16x256xbf16>
    %c0_18 = arith.constant 0 : index
    %c0_19 = arith.constant 0 : index
    %25 = vector.load %arg8[%c0_18, %c0_19] : memref<256x32xbf16, #tpu.memory_space<vmem>>, vector<256x32xbf16>
    %c0_20 = arith.constant 0 : index
    %c0_21 = arith.constant 0 : index
    %26 = vector.load %arg9[%c0_20, %c0_21] : memref<1x32xf32, #tpu.memory_space<vmem>>, vector<1x32xf32>
    %cst_22 = arith.constant dense<0.000000e+00> : vector<16x32xf32>
    %27 = tpu.matmul %24, %25, %cst_22 {dimension_numbers = #tpu.dot_dimension_numbers<[1], [0], [0], [1], [0, 0, 1, 1], [], []>} : vector<16x256xbf16>, vector<256x32xbf16>, vector<16x32xf32> -> vector<16x32xf32>
    %28 = vector.broadcast %26 : vector<1x32xf32> to vector<16x32xf32>
    %29 = arith.addf %27, %28 : vector<16x32xf32>
    %30 = arith.truncf %29 : vector<16x32xf32> to vector<16x32xbf16>
    %c0_23 = arith.constant 0 : index
    %c0_24 = arith.constant 0 : index
    %31 = vector.load %arg19[%c0_23, %c0_24] : memref<16x32xf32, #tpu.memory_space<vmem>>, vector<16x32xf32>
    tpu.vector_store %arg19[%c0_23, %c0_24], %29 {strides = array<i32>} : memref<16x32xf32, #tpu.memory_space<vmem>>, vector<16x32xf32>,
    %c0_25 = arith.constant 0 : index
    %c0_26 = arith.constant 0 : index
    %32 = vector.load %arg10[%c0_25, %c0_26] : memref<32x256xbf16, #tpu.memory_space<vmem>>, vector<32x256xbf16>
    %c0_27 = arith.constant 0 : index
    %c0_28 = arith.constant 0 : index
    %33 = vector.load %arg11[%c0_27, %c0_28] : memref<1x256xf32, #tpu.memory_space<vmem>>, vector<1x256xf32>
    %cst_29 = arith.constant dense<0.000000e+00> : vector<16x256xf32>
    %34 = tpu.matmul %30, %32, %cst_29 {dimension_numbers = #tpu.dot_dimension_numbers<[1], [0], [0], [1], [0, 0, 1, 1], [], []>} : vector<16x32xbf16>, vector<32x256xbf16>, vector<16x256xf32> -> vector<16x256xf32>
    %35 = vector.broadcast %33 : vector<1x256xf32> to vector<16x256xf32>
    %36 = arith.addf %34, %35 : vector<16x256xf32>
    %cst_30 = arith.constant 0.000000e+00 : f32
    %37 = vector.broadcast %cst_30 : f32 to vector<16x256xf32>
    %38 = arith.maximumf %36, %37 : vector<16x256xf32>
    %39 = arith.truncf %38 : vector<16x256xf32> to vector<16x256xbf16>
    %c0_31 = arith.constant 0 : index
    %c0_32 = arith.constant 0 : index
    %40 = vector.load %arg12[%c0_31, %c0_32] : memref<256x256xbf16, #tpu.memory_space<vmem>>, vector<256x256xbf16>
    %c0_33 = arith.constant 0 : index
    %c0_34 = arith.constant 0 : index
    %41 = vector.load %arg13[%c0_33, %c0_34] : memref<1x256xf32, #tpu.memory_space<vmem>>, vector<1x256xf32>
    %cst_35 = arith.constant dense<0.000000e+00> : vector<16x256xf32>
    %42 = tpu.matmul %39, %40, %cst_35 {dimension_numbers = #tpu.dot_dimension_numbers<[1], [0], [0], [1], [0, 0, 1, 1], [], []>} : vector<16x256xbf16>, vector<256x256xbf16>, vector<16x256xf32> -> vector<16x256xf32>
    %43 = vector.broadcast %41 : vector<1x256xf32> to vector<16x256xf32>
    %44 = arith.addf %42, %43 : vector<16x256xf32>
    %cst_36 = arith.constant 0.000000e+00 : f32
    %45 = vector.broadcast %cst_36 : f32 to vector<16x256xf32>
    %46 = arith.maximumf %44, %45 : vector<16x256xf32>
    %47 = arith.truncf %46 : vector<16x256xf32> to vector<16x256xbf16>
    %c0_37 = arith.constant 0 : index
    %c0_38 = arith.constant 0 : index
    %48 = vector.load %arg14[%c0_37, %c0_38] : memref<256x256xbf16, #tpu.memory_space<vmem>>, vector<256x256xbf16>
    %c0_39 = arith.constant 0 : index
    %c0_40 = arith.constant 0 : index
    %49 = vector.load %arg15[%c0_39, %c0_40] : memref<1x256xf32, #tpu.memory_space<vmem>>, vector<1x256xf32>
    %cst_41 = arith.constant dense<0.000000e+00> : vector<16x256xf32>
    %50 = tpu.matmul %47, %48, %cst_41 {dimension_numbers = #tpu.dot_dimension_numbers<[1], [0], [0], [1], [0, 0, 1, 1], [], []>} : vector<16x256xbf16>, vector<256x256xbf16>, vector<16x256xf32> -> vector<16x256xf32>
    %51 = vector.broadcast %49 : vector<1x256xf32> to vector<16x256xf32>
    %52 = arith.addf %50, %51 : vector<16x256xf32>
    %cst_42 = arith.constant 0.000000e+00 : f32
    %53 = vector.broadcast %cst_42 : f32 to vector<16x256xf32>
    %54 = arith.maximumf %52, %53 : vector<16x256xf32>
    %55 = arith.truncf %54 : vector<16x256xf32> to vector<16x256xbf16>
    %c0_43 = arith.constant 0 : index
    %c0_44 = arith.constant 0 : index
    %56 = vector.load %arg16[%c0_43, %c0_44] : memref<256x64xbf16, #tpu.memory_space<vmem>>, vector<256x64xbf16>
    %c0_45 = arith.constant 0 : index
    %c0_46 = arith.constant 0 : index
    %57 = vector.load %arg17[%c0_45, %c0_46] : memref<1x64xf32, #tpu.memory_space<vmem>>, vector<1x64xf32>
    %cst_47 = arith.constant dense<0.000000e+00> : vector<16x64xf32>
    %58 = tpu.matmul %55, %56, %cst_47 {dimension_numbers = #tpu.dot_dimension_numbers<[1], [0], [0], [1], [0, 0, 1, 1], [], []>} : vector<16x256xbf16>, vector<256x64xbf16>, vector<16x64xf32> -> vector<16x64xf32>
    %59 = vector.broadcast %57 : vector<1x64xf32> to vector<16x64xf32>
    %60 = arith.addf %58, %59 : vector<16x64xf32>
    %c0_48 = arith.constant 0 : index
    %c0_49 = arith.constant 0 : index
    %61 = vector.load %arg18[%c0_48, %c0_49] : memref<16x64xf32, #tpu.memory_space<vmem>>, vector<16x64xf32>
    tpu.vector_store %arg18[%c0_48, %c0_49], %60 {strides = array<i32>} : memref<16x64xf32, #tpu.memory_space<vmem>>, vector<16x64xf32>,
    return
  }
  func.func @transform_0(%arg0: i32) -> (i32, i32) {
    %c0_i32 = arith.constant 0 : i32
    %c0_i32_0 = arith.constant 0 : i32
    return %arg0, %c0_i32 : i32, i32
  }
  func.func @transform_1(%arg0: i32) -> (i32, i32) {
    %c0_i32 = arith.constant 0 : i32
    %c0_i32_0 = arith.constant 0 : i32
    %c0_i32_1 = arith.constant 0 : i32
    return %c0_i32, %c0_i32_0 : i32, i32
  }
  func.func @transform_2(%arg0: i32) -> (i32, i32) {
    %c0_i32 = arith.constant 0 : i32
    %c0_i32_0 = arith.constant 0 : i32
    %c0_i32_1 = arith.constant 0 : i32
    return %c0_i32, %c0_i32_0 : i32, i32
  }
  func.func @transform_3(%arg0: i32) -> (i32, i32) {
    %c0_i32 = arith.constant 0 : i32
    %c0_i32_0 = arith.constant 0 : i32
    %c0_i32_1 = arith.constant 0 : i32
    return %c0_i32, %c0_i32_0 : i32, i32
  }
  func.func @transform_4(%arg0: i32) -> (i32, i32) {
    %c0_i32 = arith.constant 0 : i32
    %c0_i32_0 = arith.constant 0 : i32
    %c0_i32_1 = arith.constant 0 : i32
    return %c0_i32, %c0_i32_0 : i32, i32
  }
  func.func @transform_5(%arg0: i32) -> (i32, i32) {
    %c0_i32 = arith.constant 0 : i32
    %c0_i32_0 = arith.constant 0 : i32
    %c0_i32_1 = arith.constant 0 : i32
    return %c0_i32, %c0_i32_0 : i32, i32
  }
  func.func @transform_6(%arg0: i32) -> (i32, i32) {
    %c0_i32 = arith.constant 0 : i32
    %c0_i32_0 = arith.constant 0 : i32
    %c0_i32_1 = arith.constant 0 : i32
    return %c0_i32, %c0_i32_0 : i32, i32
  }
  func.func @transform_7(%arg0: i32) -> (i32, i32) {
    %c0_i32 = arith.constant 0 : i32
    %c0_i32_0 = arith.constant 0 : i32
    %c0_i32_1 = arith.constant 0 : i32
    return %c0_i32, %c0_i32_0 : i32, i32
  }
  func.func @transform_8(%arg0: i32) -> (i32, i32) {
    %c0_i32 = arith.constant 0 : i32
    %c0_i32_0 = arith.constant 0 : i32
    %c0_i32_1 = arith.constant 0 : i32
    return %c0_i32, %c0_i32_0 : i32, i32
  }
  func.func @transform_9(%arg0: i32) -> (i32, i32) {
    %c0_i32 = arith.constant 0 : i32
    %c0_i32_0 = arith.constant 0 : i32
    %c0_i32_1 = arith.constant 0 : i32
    return %c0_i32, %c0_i32_0 : i32, i32
  }
  func.func @transform_10(%arg0: i32) -> (i32, i32) {
    %c0_i32 = arith.constant 0 : i32
    %c0_i32_0 = arith.constant 0 : i32
    %c0_i32_1 = arith.constant 0 : i32
    return %c0_i32, %c0_i32_0 : i32, i32
  }
  func.func @transform_11(%arg0: i32) -> (i32, i32) {
    %c0_i32 = arith.constant 0 : i32
    %c0_i32_0 = arith.constant 0 : i32
    %c0_i32_1 = arith.constant 0 : i32
    return %c0_i32, %c0_i32_0 : i32, i32
  }
  func.func @transform_12(%arg0: i32) -> (i32, i32) {
    %c0_i32 = arith.constant 0 : i32
    %c0_i32_0 = arith.constant 0 : i32
    %c0_i32_1 = arith.constant 0 : i32
    return %c0_i32, %c0_i32_0 : i32, i32
  }
  func.func @transform_13(%arg0: i32) -> (i32, i32) {
    %c0_i32 = arith.constant 0 : i32
    %c0_i32_0 = arith.constant 0 : i32
    %c0_i32_1 = arith.constant 0 : i32
    return %c0_i32, %c0_i32_0 : i32, i32
  }
  func.func @transform_14(%arg0: i32) -> (i32, i32) {
    %c0_i32 = arith.constant 0 : i32
    %c0_i32_0 = arith.constant 0 : i32
    %c0_i32_1 = arith.constant 0 : i32
    return %c0_i32, %c0_i32_0 : i32, i32
  }
  func.func @transform_15(%arg0: i32) -> (i32, i32) {
    %c0_i32 = arith.constant 0 : i32
    %c0_i32_0 = arith.constant 0 : i32
    %c0_i32_1 = arith.constant 0 : i32
    return %c0_i32, %c0_i32_0 : i32, i32
  }
  func.func @transform_16(%arg0: i32) -> (i32, i32) {
    %c0_i32 = arith.constant 0 : i32
    %c0_i32_0 = arith.constant 0 : i32
    %c0_i32_1 = arith.constant 0 : i32
    return %c0_i32, %c0_i32_0 : i32, i32
  }
  func.func @transform_17(%arg0: i32) -> (i32, i32) {
    %c0_i32 = arith.constant 0 : i32
    %c0_i32_0 = arith.constant 0 : i32
    return %arg0, %c0_i32 : i32, i32
  }
  func.func @transform_18(%arg0: i32) -> (i32, i32) {
    %c0_i32 = arith.constant 0 : i32
    %c0_i32_0 = arith.constant 0 : i32
    return %arg0, %c0_i32 : i32, i32
  }
}

</mosaic_0001>

<llo_original>
// kernel: aeprob_forward.1
$region0: #{aeprob_forward.1}
  #allocation0 [shape = 'u32[]', space=smem, size = 0x4, offset = 0x4, fixed_abs, tag = 'smem constant byte address 0x4 - core index']
  #allocation1 [shape = 'u32[144,128]{1,0:T(1,128)}', space=vmem, size = 0x12000, scoped, tag = 'internal scratch']
  %s0 = inlined_call_operand.vmem [shape: bf16[64,64], index: 0, kind: input, shape index: {}]
  %s1 = inlined_call_operand.vmem [shape: bf16[64,256], index: 1, kind: input, shape index: {}]
  %s2 = inlined_call_operand.vmem [shape: f32[1,256], index: 2, kind: input, shape index: {}]
  %s3 = inlined_call_operand.vmem [shape: bf16[256,256], index: 3, kind: input, shape index: {}]
  %s4 = inlined_call_operand.vmem [shape: f32[1,256], index: 4, kind: input, shape index: {}]
  %s5 = inlined_call_operand.vmem [shape: bf16[256,256], index: 5, kind: input, shape index: {}]
  %s6 = inlined_call_operand.vmem [shape: f32[1,256], index: 6, kind: input, shape index: {}]
  %s7 = inlined_call_operand.vmem [shape: bf16[256,32], index: 7, kind: input, shape index: {}]
  %s8 = inlined_call_operand.vmem [shape: f32[1,32], index: 8, kind: input, shape index: {}]
  %s9 = inlined_call_operand.hbm [shape: bf16[32,256], index: 9, kind: input, shape index: {}]
  %s10 = inlined_call_operand.vmem [shape: f32[1,256], index: 10, kind: input, shape index: {}]
  %s11 = inlined_call_operand.vmem [shape: bf16[256,256], index: 11, kind: input, shape index: {}]
  %s12 = inlined_call_operand.vmem [shape: f32[1,256], index: 12, kind: input, shape index: {}]
  %s13 = inlined_call_operand.hbm [shape: bf16[256,256], index: 13, kind: input, shape index: {}]
  %s14 = inlined_call_operand.vmem [shape: f32[1,256], index: 14, kind: input, shape index: {}]
  %s15 = inlined_call_operand.vmem [shape: bf16[256,64], index: 15, kind: input, shape index: {}]
  %s16 = inlined_call_operand.vmem [shape: f32[1,64], index: 16, kind: input, shape index: {}]
  %s17 = inlined_call_operand.vmem [shape: f32[64,64], index: 17, kind: output, shape index: {0}]
  %s18 = inlined_call_operand.vmem [shape: f32[64,32], index: 18, kind: output, shape index: {1}]
  %19 = xla_tuple %s17, %s18
  %s20 = sld [smem:[#allocation0]]
  $region117: #{aeprob_forward.1} parent=0
    _
  %s22 = ssub.s32 1, %s20
  %s23 = scalar_select 0, %s22, %s20
  $region1: #{aeprob_forward.1} parent=0
    #allocation2 [shape = 'u8[16384]{0}', space=vmem, size = 0x4000, scoped, tag = 'input window, operand 9, single buffered']
    #allocation3 [shape = 's32[2]{0}', space=sflag, size = 0x8, scoped, tag = 'scoped memory for aeprob_forward.1']
    #allocation4 [shape = 'u8[131072]{0}', space=vmem, size = 0x20000, scoped, tag = 'input window, operand 13, single buffered']
    #allocation5 [shape = 's32[1]{0}', space=sflag, size = 0x4, scoped, tag = 'scoped memory for aeprob_forward.1']
    %24 = vsyncpa [#allocation3], 0
    %25 = vsyncpa [#allocation5], 0
    loop: start=0, step=1, limit=6
    $region2: #{aeprob_forward.1} parent=1 // loop_pre_header
      _
    $region3: #{aeprob_forward.1} parent=1 // loop_header
      %s27 = sphi 0, %s31
      %p28 = scmp.ge.s32.totalorder %s27, 6
      %s37 = sphi 0, %s39
      %s40 = sphi 0, %s37
      %s41 = sphi 0, %s40
      %s57 = sphi 0, %s41
      %s61 = sphi 0, %s61
      %s63 = sphi 0, %s61
      %s64 = sphi 0, %s63
      %s78 = sphi 0, %s64
      %s82 = sphi 0, %s82
      %s84 = sphi 0, %s82
      %s85 = sphi 0, %s84
      %s99 = sphi 0, %s85
      %s103 = sphi 0, %s103
      %s105 = sphi 0, %s103
      %s106 = sphi 0, %s105
      %s120 = sphi 0, %s106
      %s124 = sphi 0, %s124
      %s126 = sphi 0, %s124
      %s127 = sphi 0, %s126
      %s141 = sphi 0, %s127
      %s145 = sphi 0, %s145
      %s147 = sphi 0, %s145
      %s148 = sphi 0, %s147
      %s162 = sphi 0, %s148
      %s166 = sphi 0, %s166
      %s168 = sphi 0, %s166
      %s169 = sphi 0, %s168
      %s183 = sphi 0, %s169
      %s187 = sphi 0, %s187
      %s189 = sphi 0, %s187
      %s190 = sphi 0, %s189
      %s204 = sphi 0, %s190
      %s208 = sphi 0, %s208
      %s210 = sphi 0, %s208
      %s211 = sphi 0, %s210
      %s225 = sphi 0, %s211
      %s229 = sphi 0, %s229
      %s231 = sphi 0, %s229
      %s232 = sphi 0, %s231
      %s246 = sphi 0, %s232
      %s250 = sphi 0, %s250
      %s252 = sphi 0, %s250
      %s253 = sphi 0, %s252
      %s267 = sphi 0, %s253
      %s271 = sphi 0, %s271
      %s273 = sphi 0, %s271
      %s274 = sphi 0, %s273
      %s288 = sphi 0, %s274
      %s292 = sphi 0, %s292
      %s294 = sphi 0, %s292
      %s295 = sphi 0, %s294
      %s309 = sphi 0, %s295
      %s313 = sphi 0, %s313
      %s315 = sphi 0, %s313
      %s316 = sphi 0, %s315
      %s330 = sphi 0, %s316
      %s334 = sphi 0, %s334
      %s336 = sphi 0, %s334
      %s337 = sphi 0, %s336
      %s351 = sphi 0, %s337
      %s355 = sphi 0, %s355
      %s357 = sphi 0, %s355
      %s358 = sphi 0, %s357
      %s372 = sphi 0, %s358
      %s376 = sphi 0, %s376
      %s378 = sphi 0, %s376
      %s379 = sphi 0, %s378
      %s393 = sphi 0, %s379
      %s399 = sphi 0, %s401
      %s402 = sphi 0, %s399
      %s403 = sphi 0, %s402
      %s419 = sphi 0, %s403
      %s425 = sphi 0, %s427
      %s428 = sphi 0, %s425
      %s429 = sphi 0, %s428
      %s445 = sphi 0, %s429
    $region4: #{aeprob_forward.1} parent=1 // loop_header_branch
      %30 = sbr.rel (%p28) target = $region8
    $region5: #{aeprob_forward.1} parent=1 // loop_body
      %s32 = ssub.s32 %s27, 1
      %s33 = ssub.s32 %s27, 2
      %s34 = sadd.s32 %s27, 1
      %s35 = ssub.s32 %s27, %s34
      %p36 = scmp.eq.s32.totalorder %s35, 0
      %s38 = sadd.s32 %s37, 1
      %s39 = scalar_select %p36, %s37, %s38
      %p42 = pneg %p36
      %p43 = scmp.eq.s32.totalorder %s27, 3
      %p44 = por %p42, %p43
      %p45 = scmp.ne.s32.totalorder %s37, %s40
      %p46 = scmp.eq.s32.totalorder %s27, 0
      %p47 = por %p45, %p46
      %p48 = scmp.ne.s32.totalorder %s37, %s40
      %p49 = scmp.eq.s32.totalorder %s32, 3
      %p50 = por %p48, %p49
      %p51 = scmp.ne.s32.totalorder %s40, %s41
      %p52 = scmp.eq.s32.totalorder %s32, 0
      %p53 = por %p51, %p52
      %p54 = scmp.ne.s32.totalorder %s40, %s41
      %p55 = scmp.eq.s32.totalorder %s33, 3
      %p56 = por %p54, %p55
      %p58 = scmp.ne.s32.totalorder %s41, %s57
      %p59 = scmp.eq.s32.totalorder %s33, 0
      %p60 = por %p58, %p59
      %s62 = sadd.s32 %s61, 1
      %p65 = scmp.eq.s32.totalorder %s27, 3
      %p66 = scmp.ne.s32.totalorder %s61, %s63
      %p67 = scmp.eq.s32.totalorder %s27, 0
      %p68 = por %p66, %p67
      %p69 = scmp.ne.s32.totalorder %s61, %s63
      %p70 = scmp.eq.s32.totalorder %s32, 3
      %p71 = por %p69, %p70
      %p72 = scmp.ne.s32.totalorder %s63, %s64
      %p73 = scmp.eq.s32.totalorder %s32, 0
      %p74 = por %p72, %p73
      %p75 = scmp.ne.s32.totalorder %s63, %s64
      %p76 = scmp.eq.s32.totalorder %s33, 3
      %p77 = por %p75, %p76
      %p79 = scmp.ne.s32.totalorder %s64, %s78
      %p80 = scmp.eq.s32.totalorder %s33, 0
      %p81 = por %p79, %p80
      %s83 = sadd.s32 %s82, 1
      %p86 = scmp.eq.s32.totalorder %s27, 3
      %p87 = scmp.ne.s32.totalorder %s82, %s84
      %p88 = scmp.eq.s32.totalorder %s27, 0
      %p89 = por %p87, %p88
      %p90 = scmp.ne.s32.totalorder %s82, %s84
      %p91 = scmp.eq.s32.totalorder %s32, 3
      %p92 = por %p90, %p91
      %p93 = scmp.ne.s32.totalorder %s84, %s85
      %p94 = scmp.eq.s32.totalorder %s32, 0
      %p95 = por %p93, %p94
      %p96 = scmp.ne.s32.totalorder %s84, %s85
      %p97 = scmp.eq.s32.totalorder %s33, 3
      %p98 = por %p96, %p97
      %p100 = scmp.ne.s32.totalorder %s85, %s99
      %p101 = scmp.eq.s32.totalorder %s33, 0
      %p102 = por %p100, %p101
      %s104 = sadd.s32 %s103, 1
      %p107 = scmp.eq.s32.totalorder %s27, 3
      %p108 = scmp.ne.s32.totalorder %s103, %s105
      %p109 = scmp.eq.s32.totalorder %s27, 0
      %p110 = por %p108, %p109
      %p111 = scmp.ne.s32.totalorder %s103, %s105
      %p112 = scmp.eq.s32.totalorder %s32, 3
      %p113 = por %p111, %p112
      %p114 = scmp.ne.s32.totalorder %s105, %s106
      %p115 = scmp.eq.s32.totalorder %s32, 0
      %p116 = por %p114, %p115
      %p117 = scmp.ne.s32.totalorder %s105, %s106
      %p118 = scmp.eq.s32.totalorder %s33, 3
      %p119 = por %p117, %p118
      %p121 = scmp.ne.s32.totalorder %s106, %s120
      %p122 = scmp.eq.s32.totalorder %s33, 0
      %p123 = por %p121, %p122
      %s125 = sadd.s32 %s124, 1
      %p128 = scmp.eq.s32.totalorder %s27, 3
      %p129 = scmp.ne.s32.totalorder %s124, %s126
      %p130 = scmp.eq.s32.totalorder %s27, 0
      %p131 = por %p129, %p130
      %p132 = scmp.ne.s32.totalorder %s124, %s126
      %p133 = scmp.eq.s32.totalorder %s32, 3
      %p134 = por %p132, %p133
      %p135 = scmp.ne.s32.totalorder %s126, %s127
      %p136 = scmp.eq.s32.totalorder %s32, 0
      %p137 = por %p135, %p136
      %p138 = scmp.ne.s32.totalorder %s126, %s127
      %p139 = scmp.eq.s32.totalorder %s33, 3
      %p140 = por %p138, %p139
      %p142 = scmp.ne.s32.totalorder %s127, %s141
      %p143 = scmp.eq.s32.totalorder %s33, 0
      %p144 = por %p142, %p143
      %s146 = sadd.s32 %s145, 1
      %p149 = scmp.eq.s32.totalorder %s27, 3
      %p150 = scmp.ne.s32.totalorder %s145, %s147
      %p151 = scmp.eq.s32.totalorder %s27, 0
      %p152 = por %p150, %p151
      %p153 = scmp.ne.s32.totalorder %s145, %s147
      %p154 = scmp.eq.s32.totalorder %s32, 3
      %p155 = por %p153, %p154
      %p156 = scmp.ne.s32.totalorder %s147, %s148
      %p157 = scmp.eq.s32.totalorder %s32, 0
      %p158 = por %p156, %p157
      %p159 = scmp.ne.s32.totalorder %s147, %s148
      %p160 = scmp.eq.s32.totalorder %s33, 3
      %p161 = por %p159, %p160
      %p163 = scmp.ne.s32.totalorder %s148, %s162
      %p164 = scmp.eq.s32.totalorder %s33, 0
      %p165 = por %p163, %p164
      %s167 = sadd.s32 %s166, 1
      %p170 = scmp.eq.s32.totalorder %s27, 3
      %p171 = scmp.ne.s32.totalorder %s166, %s168
      %p172 = scmp.eq.s32.totalorder %s27, 0
      %p173 = por %p171, %p172
      %p174 = scmp.ne.s32.totalorder %s166, %s168
      %p175 = scmp.eq.s32.totalorder %s32, 3
      %p176 = por %p174, %p175
      %p177 = scmp.ne.s32.totalorder %s168, %s169
      %p178 = scmp.eq.s32.totalorder %s32, 0
      %p179 = por %p177, %p178
      %p180 = scmp.ne.s32.totalorder %s168, %s169
      %p181 = scmp.eq.s32.totalorder %s33, 3
      %p182 = por %p180, %p181
      %p184 = scmp.ne.s32.totalorder %s169, %s183
      %p185 = scmp.eq.s32.totalorder %s33, 0
      %p186 = por %p184, %p185
      %s188 = sadd.s32 %s187, 1
      %p191 = scmp.eq.s32.totalorder %s27, 3
      %p192 = scmp.ne.s32.totalorder %s187, %s189
      %p193 = scmp.eq.s32.totalorder %s27, 0
      %p194 = por %p192, %p193
      %p195 = scmp.ne.s32.totalorder %s187, %s189
      %p196 = scmp.eq.s32.totalorder %s32, 3
      %p197 = por %p195, %p196
      %p198 = scmp.ne.s32.totalorder %s189, %s190
      %p199 = scmp.eq.s32.totalorder %s32, 0
      %p200 = por %p198, %p199
      %p201 = scmp.ne.s32.totalorder %s189, %s190
      %p202 = scmp.eq.s32.totalorder %s33, 3
      %p203 = por %p201, %p202
      %p205 = scmp.ne.s32.totalorder %s190, %s204
      %p206 = scmp.eq.s32.totalorder %s33, 0
      %p207 = por %p205, %p206
      %s209 = sadd.s32 %s208, 1
      %p212 = scmp.eq.s32.totalorder %s27, 3
      %p213 = scmp.ne.s32.totalorder %s208, %s210
      %p214 = scmp.eq.s32.totalorder %s27, 0
      %p215 = por %p213, %p214
      %p216 = scmp.ne.s32.totalorder %s208, %s210
      %p217 = scmp.eq.s32.totalorder %s32, 3
      %p218 = por %p216, %p217
      %p219 = scmp.ne.s32.totalorder %s210, %s211
      %p220 = scmp.eq.s32.totalorder %s32, 0
      %p221 = por %p219, %p220
      %p222 = scmp.ne.s32.totalorder %s210, %s211
      %p223 = scmp.eq.s32.totalorder %s33, 3
      %p224 = por %p222, %p223
      %p226 = scmp.ne.s32.totalorder %s211, %s225
      %p227 = scmp.eq.s32.totalorder %s33, 0
      %p228 = por %p226, %p227
      %s230 = sadd.s32 %s229, 1
      %p233 = scmp.eq.s32.totalorder %s27, 3
      %p234 = scmp.ne.s32.totalorder %s229, %s231
      %p235 = scmp.eq.s32.totalorder %s27, 0
      %p236 = por %p234, %p235
      %p237 = scmp.ne.s32.totalorder %s229, %s231
      %p238 = scmp.eq.s32.totalorder %s32, 3
      %p239 = por %p237, %p238
      %p240 = scmp.ne.s32.totalorder %s231, %s232
      %p241 = scmp.eq.s32.totalorder %s32, 0
      %p242 = por %p240, %p241
      %p243 = scmp.ne.s32.totalorder %s231, %s232
      %p244 = scmp.eq.s32.totalorder %s33, 3
      %p245 = por %p243, %p244
      %p247 = scmp.ne.s32.totalorder %s232, %s246
      %p248 = scmp.eq.s32.totalorder %s33, 0
      %p249 = por %p247, %p248
      %s251 = sadd.s32 %s250, 1
      %p254 = scmp.eq.s32.totalorder %s27, 3
      %p255 = scmp.ne.s32.totalorder %s250, %s252
      %p256 = scmp.eq.s32.totalorder %s27, 0
      %p257 = por %p255, %p256
      %p258 = scmp.ne.s32.totalorder %s250, %s252
      %p259 = scmp.eq.s32.totalorder %s32, 3
      %p260 = por %p258, %p259
      %p261 = scmp.ne.s32.totalorder %s252, %s253
      %p262 = scmp.eq.s32.totalorder %s32, 0
      %p263 = por %p261, %p262
      %p264 = scmp.ne.s32.totalorder %s252, %s253
      %p265 = scmp.eq.s32.totalorder %s33, 3
      %p266 = por %p264, %p265
      %p268 = scmp.ne.s32.totalorder %s253, %s267
      %p269 = scmp.eq.s32.totalorder %s33, 0
      %p270 = por %p268, %p269
      %s272 = sadd.s32 %s271, 1
      %p275 = scmp.eq.s32.totalorder %s27, 3
      %p276 = scmp.ne.s32.totalorder %s271, %s273
      %p277 = scmp.eq.s32.totalorder %s27, 0
      %p278 = por %p276, %p277
      %p279 = scmp.ne.s32.totalorder %s271, %s273
      %p280 = scmp.eq.s32.totalorder %s32, 3
      %p281 = por %p279, %p280
      %p282 = scmp.ne.s32.totalorder %s273, %s274
      %p283 = scmp.eq.s32.totalorder %s32, 0
      %p284 = por %p282, %p283
      %p285 = scmp.ne.s32.totalorder %s273, %s274
      %p286 = scmp.eq.s32.totalorder %s33, 3
      %p287 = por %p285, %p286
      %p289 = scmp.ne.s32.totalorder %s274, %s288
      %p290 = scmp.eq.s32.totalorder %s33, 0
      %p291 = por %p289, %p290
      %s293 = sadd.s32 %s292, 1
      %p296 = scmp.eq.s32.totalorder %s27, 3
      %p297 = scmp.ne.s32.totalorder %s292, %s294
      %p298 = scmp.eq.s32.totalorder %s27, 0
      %p299 = por %p297, %p298
      %p300 = scmp.ne.s32.totalorder %s292, %s294
      %p301 = scmp.eq.s32.totalorder %s32, 3
      %p302 = por %p300, %p301
      %p303 = scmp.ne.s32.totalorder %s294, %s295
      %p304 = scmp.eq.s32.totalorder %s32, 0
      %p305 = por %p303, %p304
      %p306 = scmp.ne.s32.totalorder %s294, %s295
      %p307 = scmp.eq.s32.totalorder %s33, 3
      %p308 = por %p306, %p307
      %p310 = scmp.ne.s32.totalorder %s295, %s309
      %p311 = scmp.eq.s32.totalorder %s33, 0
      %p312 = por %p310, %p311
      %s314 = sadd.s32 %s313, 1
      %p317 = scmp.eq.s32.totalorder %s27, 3
      %p318 = scmp.ne.s32.totalorder %s313, %s315
      %p319 = scmp.eq.s32.totalorder %s27, 0
      %p320 = por %p318, %p319
      %p321 = scmp.ne.s32.totalorder %s313, %s315
      %p322 = scmp.eq.s32.totalorder %s32, 3
      %p323 = por %p321, %p322
      %p324 = scmp.ne.s32.totalorder %s315, %s316
      %p325 = scmp.eq.s32.totalorder %s32, 0
      %p326 = por %p324, %p325
      %p327 = scmp.ne.s32.totalorder %s315, %s316
      %p328 = scmp.eq.s32.totalorder %s33, 3
      %p329 = por %p327, %p328
      %p331 = scmp.ne.s32.totalorder %s316, %s330
      %p332 = scmp.eq.s32.totalorder %s33, 0
      %p333 = por %p331, %p332
      %s335 = sadd.s32 %s334, 1
      %p338 = scmp.eq.s32.totalorder %s27, 3
      %p339 = scmp.ne.s32.totalorder %s334, %s336
      %p340 = scmp.eq.s32.totalorder %s27, 0
      %p341 = por %p339, %p340
      %p342 = scmp.ne.s32.totalorder %s334, %s336
      %p343 = scmp.eq.s32.totalorder %s32, 3
      %p344 = por %p342, %p343
      %p345 = scmp.ne.s32.totalorder %s336, %s337
      %p346 = scmp.eq.s32.totalorder %s32, 0
      %p347 = por %p345, %p346
      %p348 = scmp.ne.s32.totalorder %s336, %s337
      %p349 = scmp.eq.s32.totalorder %s33, 3
      %p350 = por %p348, %p349
      %p352 = scmp.ne.s32.totalorder %s337, %s351
      %p353 = scmp.eq.s32.totalorder %s33, 0
      %p354 = por %p352, %p353
      %s356 = sadd.s32 %s355, 1
      %p359 = scmp.eq.s32.totalorder %s27, 3
      %p360 = scmp.ne.s32.totalorder %s355, %s357
      %p361 = scmp.eq.s32.totalorder %s27, 0
      %p362 = por %p360, %p361
      %p363 = scmp.ne.s32.totalorder %s355, %s357
      %p364 = scmp.eq.s32.totalorder %s32, 3
      %p365 = por %p363, %p364
      %p366 = scmp.ne.s32.totalorder %s357, %s358
      %p367 = scmp.eq.s32.totalorder %s32, 0
      %p368 = por %p366, %p367
      %p369 = scmp.ne.s32.totalorder %s357, %s358
      %p370 = scmp.eq.s32.totalorder %s33, 3
      %p371 = por %p369, %p370
      %p373 = scmp.ne.s32.totalorder %s358, %s372
      %p374 = scmp.eq.s32.totalorder %s33, 0
      %p375 = por %p373, %p374
      %s377 = sadd.s32 %s376, 1
      %p380 = scmp.eq.s32.totalorder %s27, 3
      %p381 = scmp.ne.s32.totalorder %s376, %s378
      %p382 = scmp.eq.s32.totalorder %s27, 0
      %p383 = por %p381, %p382
      %p384 = scmp.ne.s32.totalorder %s376, %s378
      %p385 = scmp.eq.s32.totalorder %s32, 3
      %p386 = por %p384, %p385
      %p387 = scmp.ne.s32.totalorder %s378, %s379
      %p388 = scmp.eq.s32.totalorder %s32, 0
      %p389 = por %p387, %p388
      %p390 = scmp.ne.s32.totalorder %s378, %s379
      %p391 = scmp.eq.s32.totalorder %s33, 3
      %p392 = por %p390, %p391
      %p394 = scmp.ne.s32.totalorder %s379, %s393
      %p395 = scmp.eq.s32.totalorder %s33, 0
      %p396 = por %p394, %p395
      %s397 = ssub.s32 %s27, %s34
      %p398 = scmp.eq.s32.totalorder %s397, 0
      %s400 = sadd.s32 %s399, 1
      %s401 = scalar_select %p398, %s399, %s400
      %p404 = pneg %p398
      %p405 = scmp.eq.s32.totalorder %s27, 3
      %p406 = por %p404, %p405
      %p407 = scmp.ne.s32.totalorder %s399, %s402
      %p408 = scmp.eq.s32.totalorder %s27, 0
      %p409 = por %p407, %p408
      %p410 = scmp.ne.s32.totalorder %s399, %s402
      %p411 = scmp.eq.s32.totalorder %s32, 3
      %p412 = por %p410, %p411
      %p413 = scmp.ne.s32.totalorder %s402, %s403
      %p414 = scmp.eq.s32.totalorder %s32, 0
      %p415 = por %p413, %p414
      %p416 = scmp.ne.s32.totalorder %s402, %s403
      %p417 = scmp.eq.s32.totalorder %s33, 3
      %p418 = por %p416, %p417
      %p420 = scmp.ne.s32.totalorder %s403, %s419
      %p421 = scmp.eq.s32.totalorder %s33, 0
      %p422 = por %p420, %p421
      %s423 = ssub.s32 %s27, %s34
      %p424 = scmp.eq.s32.totalorder %s423, 0
      %s426 = sadd.s32 %s425, 1
      %s427 = scalar_select %p424, %s425, %s426
      %p430 = pneg %p424
      %p431 = scmp.eq.s32.totalorder %s27, 3
      %p432 = por %p430, %p431
      %p433 = scmp.ne.s32.totalorder %s425, %s428
      %p434 = scmp.eq.s32.totalorder %s27, 0
      %p435 = por %p433, %p434
      %p436 = scmp.ne.s32.totalorder %s425, %s428
      %p437 = scmp.eq.s32.totalorder %s32, 3
      %p438 = por %p436, %p437
      %p439 = scmp.ne.s32.totalorder %s428, %s429
      %p440 = scmp.eq.s32.totalorder %s32, 0
      %p441 = por %p439, %p440
      %p442 = scmp.ne.s32.totalorder %s428, %s429
      %p443 = scmp.eq.s32.totalorder %s33, 3
      %p444 = por %p442, %p443
      %p446 = scmp.ne.s32.totalorder %s429, %s445
      %p447 = scmp.eq.s32.totalorder %s33, 0
      %p448 = por %p446, %p447
      %p449 = scmp.le.s32.totalorder 1, %s27
      %p450 = scmp.lt.s32.totalorder %s27, 5
      %p451 = pnand %p449, %p450
      %p452 = pneg %p451
      // Predicated region
      $region9: #{aeprob_forward.1} parent=5 // pred_check
        _
      $region10: #{aeprob_forward.1} parent=5 // pred_check_branch
        %454 = sbr.rel (%p451) target = $region12
      $region11: #{aeprob_forward.1} parent=5 // pred_region
        %s455 = ssub.s32 %s27, 1
        // Predicated region
        $region13: #{aeprob_forward.1} parent=11 // pred_check
          %p456 = pneg %p74
        $region14: #{aeprob_forward.1} parent=11 // pred_check_branch
          %458 = sbr.rel (%p456) target = $region16
        $region15: #{aeprob_forward.1} parent=11 // pred_region
          _
        $region16: #{aeprob_forward.1} parent=11 // pred_fallthru
          _
        // Predicated region
        $region17: #{aeprob_forward.1} parent=11 // pred_check
          %p459 = pneg %p95
        $region18: #{aeprob_forward.1} parent=11 // pred_check_branch
          %461 = sbr.rel (%p459) target = $region20
        $region19: #{aeprob_forward.1} parent=11 // pred_region
          _
        $region20: #{aeprob_forward.1} parent=11 // pred_fallthru
          _
        // Predicated region
        $region21: #{aeprob_forward.1} parent=11 // pred_check
          %p462 = pneg %p116
        $region22: #{aeprob_forward.1} parent=11 // pred_check_branch
          %464 = sbr.rel (%p462) target = $region24
        $region23: #{aeprob_forward.1} parent=11 // pred_region
          _
        $region24: #{aeprob_forward.1} parent=11 // pred_fallthru
          _
        // Predicated region
        $region25: #{aeprob_forward.1} parent=11 // pred_check
          %p465 = pneg %p137
        $region26: #{aeprob_forward.1} parent=11 // pred_check_branch
          %467 = sbr.rel (%p465) target = $region28
        $region27: #{aeprob_forward.1} parent=11 // pred_region
          _
        $region28: #{aeprob_forward.1} parent=11 // pred_fallthru
          _
        // Predicated region
        $region29: #{aeprob_forward.1} parent=11 // pred_check
          %p468 = pneg %p158
        $region30: #{aeprob_forward.1} parent=11 // pred_check_branch
          %470 = sbr.rel (%p468) target = $region32
        $region31: #{aeprob_forward.1} parent=11 // pred_region
          _
        $region32: #{aeprob_forward.1} parent=11 // pred_fallthru
          _
        // Predicated region
        $region33: #{aeprob_forward.1} parent=11 // pred_check
          %p471 = pneg %p179
        $region34: #{aeprob_forward.1} parent=11 // pred_check_branch
          %473 = sbr.rel (%p471) target = $region36
        $region35: #{aeprob_forward.1} parent=11 // pred_region
          _
        $region36: #{aeprob_forward.1} parent=11 // pred_fallthru
          _
        // Predicated region
        $region37: #{aeprob_forward.1} parent=11 // pred_check
          %p474 = pneg %p200
        $region38: #{aeprob_forward.1} parent=11 // pred_check_branch
          %476 = sbr.rel (%p474) target = $region40
        $region39: #{aeprob_forward.1} parent=11 // pred_region
          _
        $region40: #{aeprob_forward.1} parent=11 // pred_fallthru
          _
        // Predicated region
        $region41: #{aeprob_forward.1} parent=11 // pred_check
          %p477 = pneg %p221
        $region42: #{aeprob_forward.1} parent=11 // pred_check_branch
          %479 = sbr.rel (%p477) target = $region44
        $region43: #{aeprob_forward.1} parent=11 // pred_region
          _
        $region44: #{aeprob_forward.1} parent=11 // pred_fallthru
          _
        // Predicated region
        $region45: #{aeprob_forward.1} parent=11 // pred_check
          %p480 = pneg %p242
        $region46: #{aeprob_forward.1} parent=11 // pred_check_branch
          %482 = sbr.rel (%p480) target = $region48
        $region47: #{aeprob_forward.1} parent=11 // pred_region
          %s484 = ssub.s32 512, 512
          %485 = vsyncadd [#allocation3], %s484
          %s486 = sshll.u32 [#allocation2], 4
          %s487 = int_to_ptr.vmem [resolvable:$true] %s486
          %492 = dma.hbm_to_vmem [thread:$0]  %s9, 512, %s487, [#allocation3], 128, 128, 8
        $region48: #{aeprob_forward.1} parent=11 // pred_fallthru
          _
        // Predicated region
        $region49: #{aeprob_forward.1} parent=11 // pred_check
          %p493 = pneg %p263
        $region50: #{aeprob_forward.1} parent=11 // pred_check_branch
          %495 = sbr.rel (%p493) target = $region52
        $region51: #{aeprob_forward.1} parent=11 // pred_region
          _
        $region52: #{aeprob_forward.1} parent=11 // pred_fallthru
          _
        // Predicated region
        $region53: #{aeprob_forward.1} parent=11 // pred_check
          %p496 = pneg %p284
        $region54: #{aeprob_forward.1} parent=11 // pred_check_branch
          %498 = sbr.rel (%p496) target = $region56
        $region55: #{aeprob_forward.1} parent=11 // pred_region
          _
        $region56: #{aeprob_forward.1} parent=11 // pred_fallthru
          _
        // Predicated region
        $region57: #{aeprob_forward.1} parent=11 // pred_check
          %p499 = pneg %p305
        $region58: #{aeprob_forward.1} parent=11 // pred_check_branch
          %501 = sbr.rel (%p499) target = $region60
        $region59: #{aeprob_forward.1} parent=11 // pred_region
          _
        $region60: #{aeprob_forward.1} parent=11 // pred_fallthru
          _
        // Predicated region
        $region61: #{aeprob_forward.1} parent=11 // pred_check
          %p502 = pneg %p326
        $region62: #{aeprob_forward.1} parent=11 // pred_check_branch
          %504 = sbr.rel (%p502) target = $region64
        $region63: #{aeprob_forward.1} parent=11 // pred_region
          %s506 = ssub.s32 4096, 4096
          %507 = vsyncadd [#allocation5], %s506
          %s508 = sshll.u32 [#allocation4], 4
          %s509 = int_to_ptr.vmem [resolvable:$true] %s508
          %514 = dma.hbm_to_vmem [thread:$0]  %s13, 4096, %s509, [#allocation5], 128, 128, 8
        $region64: #{aeprob_forward.1} parent=11 // pred_fallthru
          _
        // Predicated region
        $region65: #{aeprob_forward.1} parent=11 // pred_check
          %p515 = pneg %p347
        $region66: #{aeprob_forward.1} parent=11 // pred_check_branch
          %517 = sbr.rel (%p515) target = $region68
        $region67: #{aeprob_forward.1} parent=11 // pred_region
          _
        $region68: #{aeprob_forward.1} parent=11 // pred_fallthru
          _
        // Predicated region
        $region69: #{aeprob_forward.1} parent=11 // pred_check
          %p518 = pneg %p368
        $region70: #{aeprob_forward.1} parent=11 // pred_check_branch
          %520 = sbr.rel (%p518) target = $region72
        $region71: #{aeprob_forward.1} parent=11 // pred_region
          _
        $region72: #{aeprob_forward.1} parent=11 // pred_fallthru
          _
        // Predicated region
        $region73: #{aeprob_forward.1} parent=11 // pred_check
          %p521 = pneg %p389
        $region74: #{aeprob_forward.1} parent=11 // pred_check_branch
          %523 = sbr.rel (%p521) target = $region76
        $region75: #{aeprob_forward.1} parent=11 // pred_region
          _
        $region76: #{aeprob_forward.1} parent=11 // pred_fallthru
          _
      $region12: #{aeprob_forward.1} parent=5 // pred_fallthru
        _
      %p524 = scmp.lt.s32.totalorder %s27, 4
      // Predicated region
      $region77: #{aeprob_forward.1} parent=5 // pred_check
        %p525 = pneg %p524
      $region78: #{aeprob_forward.1} parent=5 // pred_check_branch
        %527 = sbr.rel (%p525) target = $region80
      $region79: #{aeprob_forward.1} parent=5 // pred_region
        // Predicated region
        $region81: #{aeprob_forward.1} parent=79 // pred_check
          %p528 = pneg %p47
        $region82: #{aeprob_forward.1} parent=79 // pred_check_branch
          %530 = sbr.rel (%p528) target = $region84
        $region83: #{aeprob_forward.1} parent=79 // pred_region
          %s531 = smul.u32 2, %s27
          %p532 = scmp.lt.s32.totalorder %s531, 7
          %s533 = scalar_select %p532, %s531, 7
          %s534 = smul.addr %s533, 4
          %s535 = scalar_lea.vmem %s0, %s534
          %s536 = smul.u32 2, %s27
        $region84: #{aeprob_forward.1} parent=79 // pred_fallthru
          _
      $region80: #{aeprob_forward.1} parent=5 // pred_fallthru
        _
      %p537 = scmp.le.s32.totalorder 1, %s27
      %p538 = scmp.lt.s32.totalorder %s27, 5
      %p539 = pnand %p537, %p538
      %p540 = pneg %p539
      // Predicated region
      $region85: #{aeprob_forward.1} parent=5 // pred_check
        _
      $region86: #{aeprob_forward.1} parent=5 // pred_check_branch
        %542 = sbr.rel (%p539) target = $region88
      $region87: #{aeprob_forward.1} parent=5 // pred_region
        %s543 = ssub.s32 %s27, 1
        // Predicated region
        $region89: #{aeprob_forward.1} parent=87 // pred_check
          %p544 = pneg %p242
        $region90: #{aeprob_forward.1} parent=87 // pred_check_branch
          %546 = sbr.rel (%p544) target = $region92
        $region91: #{aeprob_forward.1} parent=87 // pred_region
          %547 = dma.done [#allocation3], 512
        $region92: #{aeprob_forward.1} parent=87 // pred_fallthru
          _
        // Predicated region
        $region93: #{aeprob_forward.1} parent=87 // pred_check
          %p548 = pneg %p326
        $region94: #{aeprob_forward.1} parent=87 // pred_check_branch
          %550 = sbr.rel (%p548) target = $region96
        $region95: #{aeprob_forward.1} parent=87 // pred_region
          %551 = dma.done [#allocation5], 4096
        $region96: #{aeprob_forward.1} parent=87 // pred_fallthru
          _
        %s552 = smul.u32 2, %s32
        %p553 = scmp.lt.s32.totalorder %s552, 7
        %s554 = scalar_select %p553, %s552, 7
        %s555 = smul.addr %s554, 4
        %s556 = scalar_lea.vmem %s0, %s555
        %p557 = pneg %p53
        %p558 = pneg %p50
        %p559 = pneg %p74
        %p560 = pneg %p71
        %p561 = pneg %p95
        %p562 = pneg %p92
        %p563 = pneg %p116
        %p564 = pneg %p113
        %p565 = pneg %p137
        %p566 = pneg %p134
        %p567 = pneg %p158
        %p568 = pneg %p155
        %p569 = pneg %p179
        %p570 = pneg %p176
        %p571 = pneg %p200
        %p572 = pneg %p197
        %p573 = pneg %p221
        %p574 = pneg %p218
        %p575 = pneg %p242
        %p576 = pneg %p239
        %p577 = pneg %p263
        %p578 = pneg %p260
        %p579 = pneg %p284
        %p580 = pneg %p281
        %p581 = pneg %p305
        %p582 = pneg %p302
        %p583 = pneg %p326
        %p584 = pneg %p323
        %p585 = pneg %p347
        %p586 = pneg %p344
        %p587 = pneg %p368
        %p588 = pneg %p365
        %p589 = pneg %p389
        %p590 = pneg %p386
        %p591 = pneg %p415
        %p592 = pneg %p412
        %s593 = smul.u32 2, %s32
        %p594 = scmp.lt.s32.totalorder %s593, 7
        %s595 = scalar_select %p594, %s593, 7
        %s596 = smul.addr %s595, 8
        %s597 = scalar_lea.vmem %s17, %s596
        %p598 = pneg %p441
        %p599 = pneg %p438
        %s600 = smul.u32 2, %s32
        %p601 = scmp.lt.s32.totalorder %s600, 7
        %s602 = scalar_select %p601, %s600, 7
        %s603 = smul.addr %s602, 8
        %s604 = scalar_lea.vmem %s18, %s603
        %s605 = smul.u32 2, %s32
        %p606 = scmp.lt.s32.totalorder %s605, 7
        %s607 = scalar_select %p606, %s605, 7
        %s608 = smul.addr %s607, 4
        %s609 = scalar_lea.vmem %s0, %s608
        %s610 = smul.u32 2, %s32
        %s611 = smul.u32 2, %s32
        %p612 = scmp.lt.s32.totalorder %s611, 7
        %s613 = scalar_select %p612, %s611, 7
        %s614 = smul.addr %s613, 8
        %s615 = scalar_lea.vmem %s17, %s614
        %s616 = smul.u32 2, %s32
        %s617 = smul.u32 2, %s32
        %p618 = scmp.lt.s32.totalorder %s617, 7
        %s619 = scalar_select %p618, %s617, 7
        %s620 = smul.addr %s619, 8
        %s621 = scalar_lea.vmem %s18, %s620
        %s622 = smul.u32 2, %s32
        %v624 = vld [vmem:[%s609] sm:$0xf]
        %v625 = vld [vmem:[%s609 + $0x4] sm:$0xf]
        %v626 = vld [vmem:[%s1] sm:$0xff]
        %v627 = vld [vmem:[%s1 + $0x8] sm:$0xff]
        %v628 = vld [vmem:[%s1 + $0x10] sm:$0xff]
        %v629 = vld [vmem:[%s1 + $0x18] sm:$0xff]
        %v630 = vld [vmem:[%s1 + $0x20] sm:$0xff]
        %v631 = vld [vmem:[%s1 + $0x28] sm:$0xff]
        %v632 = vld [vmem:[%s1 + $0x30] sm:$0xff]
        %v633 = vld [vmem:[%s1 + $0x38] sm:$0xff]
        %v634 = vld [vmem:[%s2] sm:$0x3]
        %v636 = vlaneseq
        %v637 = vshrl.u32 %v636, 7
        %v638 = vsub.s32 0, %v637
        %v639 = vrot.slane %v634, %v638
        %v640 = vlaneseq
        %v641 = vshrl.u32 %v640, 7
        %v642 = vsub.s32 1, %v641
        %v643 = vrot.slane %v634, %v642
        %v648 = vunpack.c.l.b16 %v624
        %v649 = vunpack.c.l.b16 %v625
        %v650 = vpack.c.b16 %v649, %v648
        %v659 = vunpack.c.l.b16 %v626
        %v660 = vunpack.c.h.b16 %v626
        %v661 = vunpack.c.l.b16 %v627
        %v662 = vunpack.c.h.b16 %v627
        %v663 = vunpack.c.l.b16 %v628
        %v664 = vunpack.c.h.b16 %v628
        %v665 = vunpack.c.l.b16 %v629
        %v666 = vunpack.c.h.b16 %v629
        %v667 = vunpack.c.l.b16 %v630
        %v668 = vunpack.c.h.b16 %v630
        %v669 = vunpack.c.l.b16 %v631
        %v670 = vunpack.c.h.b16 %v631
        %v671 = vunpack.c.l.b16 %v632
        %v672 = vunpack.c.h.b16 %v632
        %v673 = vunpack.c.l.b16 %v633
        %v674 = vunpack.c.h.b16 %v633
        %v675 = vpack.c.b16 %v661, %v659
        %v676 = vpack.c.b16 %v662, %v660
        %v677 = vpack.c.b16 %v665, %v663
        %v678 = vpack.c.b16 %v666, %v664
        %v679 = vpack.c.b16 %v669, %v667
        %v680 = vpack.c.b16 %v670, %v668
        %v681 = vpack.c.b16 %v673, %v671
        %v682 = vpack.c.b16 %v674, %v672
        %vm691 = vcmask 523264
        %v693 = vsel %vm691, %v650, 0
        %695 = vmatprep.subr.bf16.mxu0 0
        %696 = vmatpush1.bf16.msra.mxu0 0
        %697 = vmatprep.subr.bf16.mxu0 0
        %698 = vmatpush1.bf16.msra.mxu0 0
        %699 = vmatprep.subr.bf16.mxu0 0
        %700 = vmatpush1.bf16.msra.mxu0 0
        %701 = vmatprep.subr.bf16.mxu0 0
        %702 = vmatpush1.bf16.msra.mxu0 0
        %703 = vmatprep.subr.bf16.mxu0 %v682
        %704 = vmatpush1.bf16.msra.mxu0 %v681
        %705 = vmatprep.subr.bf16.mxu0 %v680
        %706 = vmatpush1.bf16.msra.mxu0 %v679
        %707 = vmatprep.subr.bf16.mxu0 %v678
        %708 = vmatpush1.bf16.msra.mxu0 %v677
        %709 = vmatprep.subr.bf16.mxu0 %v676
        %710 = vmatpush1.bf16.msra.mxu0 %v675
        %711 = vmatprep.subr.bf16.mxu0 0
        %712 = vmatpush2.bf16.msra.mxu0 0
        %713 = vmatprep.subr.bf16.mxu0 0
        %714 = vmatpush2.bf16.msra.mxu0 0
        %715 = vmatprep.subr.bf16.mxu0 0
        %716 = vmatpush2.bf16.msra.mxu0 0
        %717 = vmatprep.subr.bf16.mxu0 0
        %718 = vmatpush2.bf16.msra.mxu0 0
        %719 = vmatprep.subr.bf16.mxu0 0
        %720 = vmatpush2.bf16.msra.mxu0 0
        %721 = vmatprep.subr.bf16.mxu0 0
        %722 = vmatpush2.bf16.msra.mxu0 0
        %723 = vmatprep.subr.bf16.mxu0 0
        %724 = vmatpush2.bf16.msra.mxu0 0
        %725 = vmatprep.subr.bf16.mxu0 0
        %726 = vmatpush2.bf16.msra.mxu0 0
        %727 = vmatprep.mubr.bf16.mxu0 0
        %728 = vmatmul.mubr.bf16.gmra.mxu0 %v693
        %v729 = vpop.f32.mrf.mxu0
        %v730 = vadd.f32 %v639, %v729
        %v731 = vpop.f32.mrf.mxu0
        %v732 = vadd.f32 %v643, %v731
        %v733 = vpop.f32.mrf.mxu0
        %v734 = vadd.f32 %v639, %v733
        %v735 = vpop.f32.mrf.mxu0
        %v736 = vadd.f32 %v643, %v735
        %737 = vdwg.mxu0
        %v738 = vmax.f32 %v730, 0.0
        %v739 = vmax.f32 %v732, 0.0
        %v740 = vmax.f32 %v734, 0.0
        %v741 = vmax.f32 %v736, 0.0
        %v742 = vpack.c.bf16 %v740, %v738
        %v743 = vpack.c.bf16 %v741, %v739
        %v744 = vld [vmem:[%s3] sm:$0xff]
        %v745 = vld [vmem:[%s3 + $0x8] sm:$0xff]
        %v746 = vld [vmem:[%s3 + $0x10] sm:$0xff]
        %v747 = vld [vmem:[%s3 + $0x18] sm:$0xff]
        %v748 = vld [vmem:[%s3 + $0x20] sm:$0xff]
        %v749 = vld [vmem:[%s3 + $0x28] sm:$0xff]
        %v750 = vld [vmem:[%s3 + $0x30] sm:$0xff]
        %v751 = vld [vmem:[%s3 + $0x38] sm:$0xff]
        %v752 = vld [vmem:[%s3 + $0x40] sm:$0xff]
        %v753 = vld [vmem:[%s3 + $0x48] sm:$0xff]
        %v754 = vld [vmem:[%s3 + $0x50] sm:$0xff]
        %v755 = vld [vmem:[%s3 + $0x58] sm:$0xff]
        %v756 = vld [vmem:[%s3 + $0x60] sm:$0xff]
        %v757 = vld [vmem:[%s3 + $0x68] sm:$0xff]
        %v758 = vld [vmem:[%s3 + $0x70] sm:$0xff]
        %v759 = vld [vmem:[%s3 + $0x78] sm:$0xff]
        %v760 = vld [vmem:[%s3 + $0x80] sm:$0xff]
        %v761 = vld [vmem:[%s3 + $0x88] sm:$0xff]
        %v762 = vld [vmem:[%s3 + $0x90] sm:$0xff]
        %v763 = vld [vmem:[%s3 + $0x98] sm:$0xff]
        %v764 = vld [vmem:[%s3 + $0xa0] sm:$0xff]
        %v765 = vld [vmem:[%s3 + $0xa8] sm:$0xff]
        %v766 = vld [vmem:[%s3 + $0xb0] sm:$0xff]
        %v767 = vld [vmem:[%s3 + $0xb8] sm:$0xff]
        %v768 = vld [vmem:[%s3 + $0xc0] sm:$0xff]
        %v769 = vld [vmem:[%s3 + $0xc8] sm:$0xff]
        %v770 = vld [vmem:[%s3 + $0xd0] sm:$0xff]
        %v771 = vld [vmem:[%s3 + $0xd8] sm:$0xff]
        %v772 = vld [vmem:[%s3 + $0xe0] sm:$0xff]
        %v773 = vld [vmem:[%s3 + $0xe8] sm:$0xff]
        %v774 = vld [vmem:[%s3 + $0xf0] sm:$0xff]
        %v775 = vld [vmem:[%s3 + $0xf8] sm:$0xff]
        %v776 = vld [vmem:[%s4] sm:$0x3]
        %v778 = vlaneseq
        %v779 = vshrl.u32 %v778, 7
        %v780 = vsub.s32 0, %v779
        %v781 = vrot.slane %v776, %v780
        %v782 = vlaneseq
        %v783 = vshrl.u32 %v782, 7
        %v784 = vsub.s32 1, %v783
        %v785 = vrot.slane %v776, %v784
        %v820 = vunpack.c.l.b16 %v744
        %v821 = vunpack.c.h.b16 %v744
        %v822 = vunpack.c.l.b16 %v745
        %v823 = vunpack.c.h.b16 %v745
        %v824 = vunpack.c.l.b16 %v746
        %v825 = vunpack.c.h.b16 %v746
        %v826 = vunpack.c.l.b16 %v747
        %v827 = vunpack.c.h.b16 %v747
        %v828 = vunpack.c.l.b16 %v748
        %v829 = vunpack.c.h.b16 %v748
        %v830 = vunpack.c.l.b16 %v749
        %v831 = vunpack.c.h.b16 %v749
        %v832 = vunpack.c.l.b16 %v750
        %v833 = vunpack.c.h.b16 %v750
        %v834 = vunpack.c.l.b16 %v751
        %v835 = vunpack.c.h.b16 %v751
        %v836 = vunpack.c.l.b16 %v752
        %v837 = vunpack.c.h.b16 %v752
        %v838 = vunpack.c.l.b16 %v753
        %v839 = vunpack.c.h.b16 %v753
        %v840 = vunpack.c.l.b16 %v754
        %v841 = vunpack.c.h.b16 %v754
        %v842 = vunpack.c.l.b16 %v755
        %v843 = vunpack.c.h.b16 %v755
        %v844 = vunpack.c.l.b16 %v756
        %v845 = vunpack.c.h.b16 %v756
        %v846 = vunpack.c.l.b16 %v757
        %v847 = vunpack.c.h.b16 %v757
        %v848 = vunpack.c.l.b16 %v758
        %v849 = vunpack.c.h.b16 %v758
        %v850 = vunpack.c.l.b16 %v759
        %v851 = vunpack.c.h.b16 %v759
        %v852 = vunpack.c.l.b16 %v760
        %v853 = vunpack.c.h.b16 %v760
        %v854 = vunpack.c.l.b16 %v761
        %v855 = vunpack.c.h.b16 %v761
        %v856 = vunpack.c.l.b16 %v762
        %v857 = vunpack.c.h.b16 %v762
        %v858 = vunpack.c.l.b16 %v763
        %v859 = vunpack.c.h.b16 %v763
        %v860 = vunpack.c.l.b16 %v764
        %v861 = vunpack.c.h.b16 %v764
        %v862 = vunpack.c.l.b16 %v765
        %v863 = vunpack.c.h.b16 %v765
        %v864 = vunpack.c.l.b16 %v766
        %v865 = vunpack.c.h.b16 %v766
        %v866 = vunpack.c.l.b16 %v767
        %v867 = vunpack.c.h.b16 %v767
        %v868 = vunpack.c.l.b16 %v768
        %v869 = vunpack.c.h.b16 %v768
        %v870 = vunpack.c.l.b16 %v769
        %v871 = vunpack.c.h.b16 %v769
        %v872 = vunpack.c.l.b16 %v770
        %v873 = vunpack.c.h.b16 %v770
        %v874 = vunpack.c.l.b16 %v771
        %v875 = vunpack.c.h.b16 %v771
        %v876 = vunpack.c.l.b16 %v772
        %v877 = vunpack.c.h.b16 %v772
        %v878 = vunpack.c.l.b16 %v773
        %v879 = vunpack.c.h.b16 %v773
        %v880 = vunpack.c.l.b16 %v774
        %v881 = vunpack.c.h.b16 %v774
        %v882 = vunpack.c.l.b16 %v775
        %v883 = vunpack.c.h.b16 %v775
        %v884 = vpack.c.b16 %v822, %v820
        %v885 = vpack.c.b16 %v823, %v821
        %v886 = vpack.c.b16 %v826, %v824
        %v887 = vpack.c.b16 %v827, %v825
        %v888 = vpack.c.b16 %v830, %v828
        %v889 = vpack.c.b16 %v831, %v829
        %v890 = vpack.c.b16 %v834, %v832
        %v891 = vpack.c.b16 %v835, %v833
        %v892 = vpack.c.b16 %v838, %v836
        %v893 = vpack.c.b16 %v839, %v837
        %v894 = vpack.c.b16 %v842, %v840
        %v895 = vpack.c.b16 %v843, %v841
        %v896 = vpack.c.b16 %v846, %v844
        %v897 = vpack.c.b16 %v847, %v845
        %v898 = vpack.c.b16 %v850, %v848
        %v899 = vpack.c.b16 %v851, %v849
        %v900 = vpack.c.b16 %v854, %v852
        %v901 = vpack.c.b16 %v855, %v853
        %v902 = vpack.c.b16 %v858, %v856
        %v903 = vpack.c.b16 %v859, %v857
        %v904 = vpack.c.b16 %v862, %v860
        %v905 = vpack.c.b16 %v863, %v861
        %v906 = vpack.c.b16 %v866, %v864
        %v907 = vpack.c.b16 %v867, %v865
        %v908 = vpack.c.b16 %v870, %v868
        %v909 = vpack.c.b16 %v871, %v869
        %v910 = vpack.c.b16 %v874, %v872
        %v911 = vpack.c.b16 %v875, %v873
        %v912 = vpack.c.b16 %v878, %v876
        %v913 = vpack.c.b16 %v879, %v877
        %v914 = vpack.c.b16 %v882, %v880
        %v915 = vpack.c.b16 %v883, %v881
        %948 = vmatprep.subr.bf16.mxu0 %v899
        %949 = vmatpush1.bf16.msra.mxu0 %v898
        %950 = vmatprep.subr.bf16.mxu0 %v897
        %951 = vmatpush1.bf16.msra.mxu0 %v896
        %952 = vmatprep.subr.bf16.mxu0 %v895
        %953 = vmatpush1.bf16.msra.mxu0 %v894
        %954 = vmatprep.subr.bf16.mxu0 %v893
        %955 = vmatpush1.bf16.msra.mxu0 %v892
        %956 = vmatprep.subr.bf16.mxu0 %v891
        %957 = vmatpush1.bf16.msra.mxu0 %v890
        %958 = vmatprep.subr.bf16.mxu0 %v889
        %959 = vmatpush1.bf16.msra.mxu0 %v888
        %960 = vmatprep.subr.bf16.mxu0 %v887
        %961 = vmatpush1.bf16.msra.mxu0 %v886
        %962 = vmatprep.subr.bf16.mxu0 %v885
        %963 = vmatpush1.bf16.msra.mxu0 %v884
        %964 = vmatprep.subr.bf16.mxu0 %v915
        %965 = vmatpush2.bf16.msra.mxu0 %v914
        %966 = vmatprep.subr.bf16.mxu0 %v913
        %967 = vmatpush2.bf16.msra.mxu0 %v912
        %968 = vmatprep.subr.bf16.mxu0 %v911
        %969 = vmatpush2.bf16.msra.mxu0 %v910
        %970 = vmatprep.subr.bf16.mxu0 %v909
        %971 = vmatpush2.bf16.msra.mxu0 %v908
        %972 = vmatprep.subr.bf16.mxu0 %v907
        %973 = vmatpush2.bf16.msra.mxu0 %v906
        %974 = vmatprep.subr.bf16.mxu0 %v905
        %975 = vmatpush2.bf16.msra.mxu0 %v904
        %976 = vmatprep.subr.bf16.mxu0 %v903
        %977 = vmatpush2.bf16.msra.mxu0 %v902
        %978 = vmatprep.subr.bf16.mxu0 %v901
        %979 = vmatpush2.bf16.msra.mxu0 %v900
        %980 = vmatprep.mubr.bf16.mxu0 %v743
        %981 = vmatmul.mubr.bf16.gmra.mxu0 %v742
        %v982 = vpop.f32.mrf.mxu0
        %v983 = vadd.f32 %v781, %v982
        %v984 = vpop.f32.mrf.mxu0
        %v985 = vadd.f32 %v785, %v984
        %v986 = vpop.f32.mrf.mxu0
        %v987 = vadd.f32 %v781, %v986
        %v988 = vpop.f32.mrf.mxu0
        %v989 = vadd.f32 %v785, %v988
        %990 = vdwg.mxu0
        %v991 = vmax.f32 %v983, 0.0
        %v992 = vmax.f32 %v985, 0.0
        %v993 = vmax.f32 %v987, 0.0
        %v994 = vmax.f32 %v989, 0.0
        %v995 = vpack.c.bf16 %v993, %v991
        %v996 = vpack.c.bf16 %v994, %v992
        %v997 = vld [vmem:[%s5] sm:$0xff]
        %v998 = vld [vmem:[%s5 + $0x8] sm:$0xff]
        %v999 = vld [vmem:[%s5 + $0x10] sm:$0xff]
        %v1000 = vld [vmem:[%s5 + $0x18] sm:$0xff]
        %v1001 = vld [vmem:[%s5 + $0x20] sm:$0xff]
        %v1002 = vld [vmem:[%s5 + $0x28] sm:$0xff]
        %v1003 = vld [vmem:[%s5 + $0x30] sm:$0xff]
        %v1004 = vld [vmem:[%s5 + $0x38] sm:$0xff]
        %v1005 = vld [vmem:[%s5 + $0x40] sm:$0xff]
        %v1006 = vld [vmem:[%s5 + $0x48] sm:$0xff]
        %v1007 = vld [vmem:[%s5 + $0x50] sm:$0xff]
        %v1008 = vld [vmem:[%s5 + $0x58] sm:$0xff]
        %v1009 = vld [vmem:[%s5 + $0x60] sm:$0xff]
        %v1010 = vld [vmem:[%s5 + $0x68] sm:$0xff]
        %v1011 = vld [vmem:[%s5 + $0x70] sm:$0xff]
        %v1012 = vld [vmem:[%s5 + $0x78] sm:$0xff]
        %v1013 = vld [vmem:[%s5 + $0x80] sm:$0xff]
        %v1014 = vld [vmem:[%s5 + $0x88] sm:$0xff]
        %v1015 = vld [vmem:[%s5 + $0x90] sm:$0xff]
        %v1016 = vld [vmem:[%s5 + $0x98] sm:$0xff]
        %v1017 = vld [vmem:[%s5 + $0xa0] sm:$0xff]
        %v1018 = vld [vmem:[%s5 + $0xa8] sm:$0xff]
        %v1019 = vld [vmem:[%s5 + $0xb0] sm:$0xff]
        %v1020 = vld [vmem:[%s5 + $0xb8] sm:$0xff]
        %v1021 = vld [vmem:[%s5 + $0xc0] sm:$0xff]
        %v1022 = vld [vmem:[%s5 + $0xc8] sm:$0xff]
        %v1023 = vld [vmem:[%s5 + $0xd0] sm:$0xff]
        %v1024 = vld [vmem:[%s5 + $0xd8] sm:$0xff]
        %v1025 = vld [vmem:[%s5 + $0xe0] sm:$0xff]
        %v1026 = vld [vmem:[%s5 + $0xe8] sm:$0xff]
        %v1027 = vld [vmem:[%s5 + $0xf0] sm:$0xff]
        %v1028 = vld [vmem:[%s5 + $0xf8] sm:$0xff]
        %v1029 = vld [vmem:[%s6] sm:$0x3]
        %v1031 = vlaneseq
        %v1032 = vshrl.u32 %v1031, 7
        %v1033 = vsub.s32 0, %v1032
        %v1034 = vrot.slane %v1029, %v1033
        %v1035 = vlaneseq
        %v1036 = vshrl.u32 %v1035, 7
        %v1037 = vsub.s32 1, %v1036
        %v1038 = vrot.slane %v1029, %v1037
        %v1073 = vunpack.c.l.b16 %v997
        %v1074 = vunpack.c.h.b16 %v997
        %v1075 = vunpack.c.l.b16 %v998
        %v1076 = vunpack.c.h.b16 %v998
        %v1077 = vunpack.c.l.b16 %v999
        %v1078 = vunpack.c.h.b16 %v999
        %v1079 = vunpack.c.l.b16 %v1000
        %v1080 = vunpack.c.h.b16 %v1000
        %v1081 = vunpack.c.l.b16 %v1001
        %v1082 = vunpack.c.h.b16 %v1001
        %v1083 = vunpack.c.l.b16 %v1002
        %v1084 = vunpack.c.h.b16 %v1002
        %v1085 = vunpack.c.l.b16 %v1003
        %v1086 = vunpack.c.h.b16 %v1003
        %v1087 = vunpack.c.l.b16 %v1004
        %v1088 = vunpack.c.h.b16 %v1004
        %v1089 = vunpack.c.l.b16 %v1005
        %v1090 = vunpack.c.h.b16 %v1005
        %v1091 = vunpack.c.l.b16 %v1006
        %v1092 = vunpack.c.h.b16 %v1006
        %v1093 = vunpack.c.l.b16 %v1007
        %v1094 = vunpack.c.h.b16 %v1007
        %v1095 = vunpack.c.l.b16 %v1008
        %v1096 = vunpack.c.h.b16 %v1008
        %v1097 = vunpack.c.l.b16 %v1009
        %v1098 = vunpack.c.h.b16 %v1009
        %v1099 = vunpack.c.l.b16 %v1010
        %v1100 = vunpack.c.h.b16 %v1010
        %v1101 = vunpack.c.l.b16 %v1011
        %v1102 = vunpack.c.h.b16 %v1011
        %v1103 = vunpack.c.l.b16 %v1012
        %v1104 = vunpack.c.h.b16 %v1012
        %v1105 = vunpack.c.l.b16 %v1013
        %v1106 = vunpack.c.h.b16 %v1013
        %v1107 = vunpack.c.l.b16 %v1014
        %v1108 = vunpack.c.h.b16 %v1014
        %v1109 = vunpack.c.l.b16 %v1015
        %v1110 = vunpack.c.h.b16 %v1015
        %v1111 = vunpack.c.l.b16 %v1016
        %v1112 = vunpack.c.h.b16 %v1016
        %v1113 = vunpack.c.l.b16 %v1017
        %v1114 = vunpack.c.h.b16 %v1017
        %v1115 = vunpack.c.l.b16 %v1018
        %v1116 = vunpack.c.h.b16 %v1018
        %v1117 = vunpack.c.l.b16 %v1019
        %v1118 = vunpack.c.h.b16 %v1019
        %v1119 = vunpack.c.l.b16 %v1020
        %v1120 = vunpack.c.h.b16 %v1020
        %v1121 = vunpack.c.l.b16 %v1021
        %v1122 = vunpack.c.h.b16 %v1021
        %v1123 = vunpack.c.l.b16 %v1022
        %v1124 = vunpack.c.h.b16 %v1022
        %v1125 = vunpack.c.l.b16 %v1023
        %v1126 = vunpack.c.h.b16 %v1023
        %v1127 = vunpack.c.l.b16 %v1024
        %v1128 = vunpack.c.h.b16 %v1024
        %v1129 = vunpack.c.l.b16 %v1025
        %v1130 = vunpack.c.h.b16 %v1025
        %v1131 = vunpack.c.l.b16 %v1026
        %v1132 = vunpack.c.h.b16 %v1026
        %v1133 = vunpack.c.l.b16 %v1027
        %v1134 = vunpack.c.h.b16 %v1027
        %v1135 = vunpack.c.l.b16 %v1028
        %v1136 = vunpack.c.h.b16 %v1028
        %v1137 = vpack.c.b16 %v1075, %v1073
        %v1138 = vpack.c.b16 %v1076, %v1074
        %v1139 = vpack.c.b16 %v1079, %v1077
        %v1140 = vpack.c.b16 %v1080, %v1078
        %v1141 = vpack.c.b16 %v1083, %v1081
        %v1142 = vpack.c.b16 %v1084, %v1082
        %v1143 = vpack.c.b16 %v1087, %v1085
        %v1144 = vpack.c.b16 %v1088, %v1086
        %v1145 = vpack.c.b16 %v1091, %v1089
        %v1146 = vpack.c.b16 %v1092, %v1090
        %v1147 = vpack.c.b16 %v1095, %v1093
        %v1148 = vpack.c.b16 %v1096, %v1094
        %v1149 = vpack.c.b16 %v1099, %v1097
        %v1150 = vpack.c.b16 %v1100, %v1098
        %v1151 = vpack.c.b16 %v1103, %v1101
        %v1152 = vpack.c.b16 %v1104, %v1102
        %v1153 = vpack.c.b16 %v1107, %v1105
        %v1154 = vpack.c.b16 %v1108, %v1106
        %v1155 = vpack.c.b16 %v1111, %v1109
        %v1156 = vpack.c.b16 %v1112, %v1110
        %v1157 = vpack.c.b16 %v1115, %v1113
        %v1158 = vpack.c.b16 %v1116, %v1114
        %v1159 = vpack.c.b16 %v1119, %v1117
        %v1160 = vpack.c.b16 %v1120, %v1118
        %v1161 = vpack.c.b16 %v1123, %v1121
        %v1162 = vpack.c.b16 %v1124, %v1122
        %v1163 = vpack.c.b16 %v1127, %v1125
        %v1164 = vpack.c.b16 %v1128, %v1126
        %v1165 = vpack.c.b16 %v1131, %v1129
        %v1166 = vpack.c.b16 %v1132, %v1130
        %v1167 = vpack.c.b16 %v1135, %v1133
        %v1168 = vpack.c.b16 %v1136, %v1134
        %1201 = vmatprep.subr.bf16.mxu0 %v1152
        %1202 = vmatpush1.bf16.msra.mxu0 %v1151
        %1203 = vmatprep.subr.bf16.mxu0 %v1150
        %1204 = vmatpush1.bf16.msra.mxu0 %v1149
        %1205 = vmatprep.subr.bf16.mxu0 %v1148
        %1206 = vmatpush1.bf16.msra.mxu0 %v1147
        %1207 = vmatprep.subr.bf16.mxu0 %v1146
        %1208 = vmatpush1.bf16.msra.mxu0 %v1145
        %1209 = vmatprep.subr.bf16.mxu0 %v1144
        %1210 = vmatpush1.bf16.msra.mxu0 %v1143
        %1211 = vmatprep.subr.bf16.mxu0 %v1142
        %1212 = vmatpush1.bf16.msra.mxu0 %v1141
        %1213 = vmatprep.subr.bf16.mxu0 %v1140
        %1214 = vmatpush1.bf16.msra.mxu0 %v1139
        %1215 = vmatprep.subr.bf16.mxu0 %v1138
        %1216 = vmatpush1.bf16.msra.mxu0 %v1137
        %1217 = vmatprep.subr.bf16.mxu0 %v1168
        %1218 = vmatpush2.bf16.msra.mxu0 %v1167
        %1219 = vmatprep.subr.bf16.mxu0 %v1166
        %1220 = vmatpush2.bf16.msra.mxu0 %v1165
        %1221 = vmatprep.subr.bf16.mxu0 %v1164
        %1222 = vmatpush2.bf16.msra.mxu0 %v1163
        %1223 = vmatprep.subr.bf16.mxu0 %v1162
        %1224 = vmatpush2.bf16.msra.mxu0 %v1161
        %1225 = vmatprep.subr.bf16.mxu0 %v1160
        %1226 = vmatpush2.bf16.msra.mxu0 %v1159
        %1227 = vmatprep.subr.bf16.mxu0 %v1158
        %1228 = vmatpush2.bf16.msra.mxu0 %v1157
        %1229 = vmatprep.subr.bf16.mxu0 %v1156
        %1230 = vmatpush2.bf16.msra.mxu0 %v1155
        %1231 = vmatprep.subr.bf16.mxu0 %v1154
        %1232 = vmatpush2.bf16.msra.mxu0 %v1153
        %1233 = vmatprep.mubr.bf16.mxu0 %v996
        %1234 = vmatmul.mubr.bf16.gmra.mxu0 %v995
        %v1235 = vpop.f32.mrf.mxu0
        %v1236 = vadd.f32 %v1034, %v1235
        %v1237 = vpop.f32.mrf.mxu0
        %v1238 = vadd.f32 %v1038, %v1237
        %v1239 = vpop.f32.mrf.mxu0
        %v1240 = vadd.f32 %v1034, %v1239
        %v1241 = vpop.f32.mrf.mxu0
        %v1242 = vadd.f32 %v1038, %v1241
        %1243 = vdwg.mxu0
        %v1244 = vmax.f32 %v1236, 0.0
        %v1245 = vmax.f32 %v1238, 0.0
        %v1246 = vmax.f32 %v1240, 0.0
        %v1247 = vmax.f32 %v1242, 0.0
        %v1248 = vpack.c.bf16 %v1246, %v1244
        %v1249 = vpack.c.bf16 %v1247, %v1245
        %v1250 = vld [vmem:[%s7] sm:$0xf]
        %v1251 = vld [vmem:[%s7 + $0x4] sm:$0xf]
        %v1252 = vld [vmem:[%s7 + $0x8] sm:$0xf]
        %v1253 = vld [vmem:[%s7 + $0xc] sm:$0xf]
        %v1254 = vld [vmem:[%s7 + $0x10] sm:$0xf]
        %v1255 = vld [vmem:[%s7 + $0x14] sm:$0xf]
        %v1256 = vld [vmem:[%s7 + $0x18] sm:$0xf]
        %v1257 = vld [vmem:[%s7 + $0x1c] sm:$0xf]
        %v1258 = vld [vmem:[%s7 + $0x20] sm:$0xf]
        %v1259 = vld [vmem:[%s7 + $0x24] sm:$0xf]
        %v1260 = vld [vmem:[%s7 + $0x28] sm:$0xf]
        %v1261 = vld [vmem:[%s7 + $0x2c] sm:$0xf]
        %v1262 = vld [vmem:[%s7 + $0x30] sm:$0xf]
        %v1263 = vld [vmem:[%s7 + $0x34] sm:$0xf]
        %v1264 = vld [vmem:[%s7 + $0x38] sm:$0xf]
        %v1265 = vld [vmem:[%s7 + $0x3c] sm:$0xf]
        %v1266 = vld [vmem:[%s7 + $0x40] sm:$0xf]
        %v1267 = vld [vmem:[%s7 + $0x44] sm:$0xf]
        %v1268 = vld [vmem:[%s7 + $0x48] sm:$0xf]
        %v1269 = vld [vmem:[%s7 + $0x4c] sm:$0xf]
        %v1270 = vld [vmem:[%s7 + $0x50] sm:$0xf]
        %v1271 = vld [vmem:[%s7 + $0x54] sm:$0xf]
        %v1272 = vld [vmem:[%s7 + $0x58] sm:$0xf]
        %v1273 = vld [vmem:[%s7 + $0x5c] sm:$0xf]
        %v1274 = vld [vmem:[%s7 + $0x60] sm:$0xf]
        %v1275 = vld [vmem:[%s7 + $0x64] sm:$0xf]
        %v1276 = vld [vmem:[%s7 + $0x68] sm:$0xf]
        %v1277 = vld [vmem:[%s7 + $0x6c] sm:$0xf]
        %v1278 = vld [vmem:[%s7 + $0x70] sm:$0xf]
        %v1279 = vld [vmem:[%s7 + $0x74] sm:$0xf]
        %v1280 = vld [vmem:[%s7 + $0x78] sm:$0xf]
        %v1281 = vld [vmem:[%s7 + $0x7c] sm:$0xf]
        %v1282 = vld [vmem:[%s8] sm:$0x1]
        %v1284 = vlaneseq
        %v1285 = vshrl.u32 %v1284, 7
        %v1286 = vsub.s32 0, %v1285
        %v1287 = vrot.slane %v1282, %v1286
        %v1321 = vunpack.c.l.b16 %v1250
        %v1322 = vunpack.c.l.b16 %v1251
        %v1323 = vunpack.c.l.b16 %v1252
        %v1324 = vunpack.c.l.b16 %v1253
        %v1325 = vunpack.c.l.b16 %v1254
        %v1326 = vunpack.c.l.b16 %v1255
        %v1327 = vunpack.c.l.b16 %v1256
        %v1328 = vunpack.c.l.b16 %v1257
        %v1329 = vunpack.c.l.b16 %v1258
        %v1330 = vunpack.c.l.b16 %v1259
        %v1331 = vunpack.c.l.b16 %v1260
        %v1332 = vunpack.c.l.b16 %v1261
        %v1333 = vunpack.c.l.b16 %v1262
        %v1334 = vunpack.c.l.b16 %v1263
        %v1335 = vunpack.c.l.b16 %v1264
        %v1336 = vunpack.c.l.b16 %v1265
        %v1337 = vunpack.c.l.b16 %v1266
        %v1338 = vunpack.c.l.b16 %v1267
        %v1339 = vunpack.c.l.b16 %v1268
        %v1340 = vunpack.c.l.b16 %v1269
        %v1341 = vunpack.c.l.b16 %v1270
        %v1342 = vunpack.c.l.b16 %v1271
        %v1343 = vunpack.c.l.b16 %v1272
        %v1344 = vunpack.c.l.b16 %v1273
        %v1345 = vunpack.c.l.b16 %v1274
        %v1346 = vunpack.c.l.b16 %v1275
        %v1347 = vunpack.c.l.b16 %v1276
        %v1348 = vunpack.c.l.b16 %v1277
        %v1349 = vunpack.c.l.b16 %v1278
        %v1350 = vunpack.c.l.b16 %v1279
        %v1351 = vunpack.c.l.b16 %v1280
        %v1352 = vunpack.c.l.b16 %v1281
        %v1353 = vpack.c.b16 %v1322, %v1321
        %v1354 = vpack.c.b16 %v1324, %v1323
        %v1355 = vpack.c.b16 %v1326, %v1325
        %v1356 = vpack.c.b16 %v1328, %v1327
        %v1357 = vpack.c.b16 %v1330, %v1329
        %v1358 = vpack.c.b16 %v1332, %v1331
        %v1359 = vpack.c.b16 %v1334, %v1333
        %v1360 = vpack.c.b16 %v1336, %v1335
        %v1361 = vpack.c.b16 %v1338, %v1337
        %v1362 = vpack.c.b16 %v1340, %v1339
        %v1363 = vpack.c.b16 %v1342, %v1341
        %v1364 = vpack.c.b16 %v1344, %v1343
        %v1365 = vpack.c.b16 %v1346, %v1345
        %v1366 = vpack.c.b16 %v1348, %v1347
        %v1367 = vpack.c.b16 %v1350, %v1349
        %v1368 = vpack.c.b16 %v1352, %v1351
        %1385 = vmatprep.subr.bf16.mxu0 0
        %1386 = vmatpush1.bf16.msra.mxu0 %v1360
        %1387 = vmatprep.subr.bf16.mxu0 0
        %1388 = vmatpush1.bf16.msra.mxu0 %v1359
        %1389 = vmatprep.subr.bf16.mxu0 0
        %1390 = vmatpush1.bf16.msra.mxu0 %v1358
        %1391 = vmatprep.subr.bf16.mxu0 0
        %1392 = vmatpush1.bf16.msra.mxu0 %v1357
        %1393 = vmatprep.subr.bf16.mxu0 0
        %1394 = vmatpush1.bf16.msra.mxu0 %v1356
        %1395 = vmatprep.subr.bf16.mxu0 0
        %1396 = vmatpush1.bf16.msra.mxu0 %v1355
        %1397 = vmatprep.subr.bf16.mxu0 0
        %1398 = vmatpush1.bf16.msra.mxu0 %v1354
        %1399 = vmatprep.subr.bf16.mxu0 0
        %1400 = vmatpush1.bf16.msra.mxu0 %v1353
        %1401 = vmatprep.subr.bf16.mxu0 0
        %1402 = vmatpush2.bf16.msra.mxu0 %v1368
        %1403 = vmatprep.subr.bf16.mxu0 0
        %1404 = vmatpush2.bf16.msra.mxu0 %v1367
        %1405 = vmatprep.subr.bf16.mxu0 0
        %1406 = vmatpush2.bf16.msra.mxu0 %v1366
        %1407 = vmatprep.subr.bf16.mxu0 0
        %1408 = vmatpush2.bf16.msra.mxu0 %v1365
        %1409 = vmatprep.subr.bf16.mxu0 0
        %1410 = vmatpush2.bf16.msra.mxu0 %v1364
        %1411 = vmatprep.subr.bf16.mxu0 0
        %1412 = vmatpush2.bf16.msra.mxu0 %v1363
        %1413 = vmatprep.subr.bf16.mxu0 0
        %1414 = vmatpush2.bf16.msra.mxu0 %v1362
        %1415 = vmatprep.subr.bf16.mxu0 0
        %1416 = vmatpush2.bf16.msra.mxu0 %v1361
        %1417 = vmatprep.mubr.bf16.mxu0 %v1249
        %1418 = vmatmul.mubr.bf16.gmra.mxu0 %v1248
        %v1419 = vpop.f32.mrf.mxu0
        %v1420 = vadd.f32 %v1287, %v1419
        %v1421 = vpop.f32.mrf.mxu0
        %v1422 = vpop.f32.mrf.mxu0
        %v1423 = vadd.f32 %v1287, %v1422
        %v1424 = vpop.f32.mrf.mxu0
        %1425 = vdwg.mxu0
        %v1426 = vpack.c.bf16 %v1423, %v1420
        %vm1427 = vcmask 261120
        %1428 = vst.msk [vmem:[%s621] sm:$0xff] %vm1427, %v1420
        %1429 = vst.msk [vmem:[%s621 + $0x8] sm:$0xff] %vm1427, %v1423
        %v1430 = vld [vmem:[#allocation2] sm:$0xff]
        %v1431 = vld [vmem:[#allocation2 + $0x8] sm:$0xff]
        %v1432 = vld [vmem:[#allocation2 + $0x10] sm:$0xff]
        %v1433 = vld [vmem:[#allocation2 + $0x18] sm:$0xff]
        %v1434 = vld [vmem:[%s10] sm:$0x3]
        %v1436 = vlaneseq
        %v1437 = vshrl.u32 %v1436, 7
        %v1438 = vsub.s32 0, %v1437
        %v1439 = vrot.slane %v1434, %v1438
        %v1440 = vlaneseq
        %v1441 = vshrl.u32 %v1440, 7
        %v1442 = vsub.s32 1, %v1441
        %v1443 = vrot.slane %v1434, %v1442
        %v1450 = vunpack.c.l.b16 %v1430
        %v1451 = vunpack.c.h.b16 %v1430
        %v1452 = vunpack.c.l.b16 %v1431
        %v1453 = vunpack.c.h.b16 %v1431
        %v1454 = vunpack.c.l.b16 %v1432
        %v1455 = vunpack.c.h.b16 %v1432
        %v1456 = vunpack.c.l.b16 %v1433
        %v1457 = vunpack.c.h.b16 %v1433
        %v1458 = vpack.c.b16 %v1452, %v1450
        %v1459 = vpack.c.b16 %v1453, %v1451
        %v1460 = vpack.c.b16 %v1456, %v1454
        %v1461 = vpack.c.b16 %v1457, %v1455
        %v1467 = vsel %vm1427, %v1426, 0
        %1469 = vmatprep.subr.bf16.mxu0 0
        %1470 = vmatpush1.bf16.msra.mxu0 0
        %1471 = vmatprep.subr.bf16.mxu0 0
        %1472 = vmatpush1.bf16.msra.mxu0 0
        %1473 = vmatprep.subr.bf16.mxu0 0
        %1474 = vmatpush1.bf16.msra.mxu0 0
        %1475 = vmatprep.subr.bf16.mxu0 0
        %1476 = vmatpush1.bf16.msra.mxu0 0
        %1477 = vmatprep.subr.bf16.mxu0 0
        %1478 = vmatpush1.bf16.msra.mxu0 0
        %1479 = vmatprep.subr.bf16.mxu0 0
        %1480 = vmatpush1.bf16.msra.mxu0 0
        %1481 = vmatprep.subr.bf16.mxu0 %v1461
        %1482 = vmatpush1.bf16.msra.mxu0 %v1460
        %1483 = vmatprep.subr.bf16.mxu0 %v1459
        %1484 = vmatpush1.bf16.msra.mxu0 %v1458
        %1485 = vmatprep.subr.bf16.mxu0 0
        %1486 = vmatpush2.bf16.msra.mxu0 0
        %1487 = vmatprep.subr.bf16.mxu0 0
        %1488 = vmatpush2.bf16.msra.mxu0 0
        %1489 = vmatprep.subr.bf16.mxu0 0
        %1490 = vmatpush2.bf16.msra.mxu0 0
        %1491 = vmatprep.subr.bf16.mxu0 0
        %1492 = vmatpush2.bf16.msra.mxu0 0
        %1493 = vmatprep.subr.bf16.mxu0 0
        %1494 = vmatpush2.bf16.msra.mxu0 0
        %1495 = vmatprep.subr.bf16.mxu0 0
        %1496 = vmatpush2.bf16.msra.mxu0 0
        %1497 = vmatprep.subr.bf16.mxu0 0
        %1498 = vmatpush2.bf16.msra.mxu0 0
        %1499 = vmatprep.subr.bf16.mxu0 0
        %1500 = vmatpush2.bf16.msra.mxu0 0
        %1501 = vmatprep.mubr.bf16.mxu0 0
        %1502 = vmatmul.mubr.bf16.gmra.mxu0 %v1467
        %v1503 = vpop.f32.mrf.mxu0
        %v1504 = vadd.f32 %v1439, %v1503
        %v1505 = vpop.f32.mrf.mxu0
        %v1506 = vadd.f32 %v1443, %v1505
        %v1507 = vpop.f32.mrf.mxu0
        %v1508 = vadd.f32 %v1439, %v1507
        %v1509 = vpop.f32.mrf.mxu0
        %v1510 = vadd.f32 %v1443, %v1509
        %1511 = vdwg.mxu0
        %v1512 = vmax.f32 %v1504, 0.0
        %v1513 = vmax.f32 %v1506, 0.0
        %v1514 = vmax.f32 %v1508, 0.0
        %v1515 = vmax.f32 %v1510, 0.0
        %v1516 = vpack.c.bf16 %v1514, %v1512
        %v1517 = vpack.c.bf16 %v1515, %v1513
        %v1518 = vld [vmem:[%s11] sm:$0xff]
        %v1519 = vld [vmem:[%s11 + $0x8] sm:$0xff]
        %v1520 = vld [vmem:[%s11 + $0x10] sm:$0xff]
        %v1521 = vld [vmem:[%s11 + $0x18] sm:$0xff]
        %v1522 = vld [vmem:[%s11 + $0x20] sm:$0xff]
        %v1523 = vld [vmem:[%s11 + $0x28] sm:$0xff]
        %v1524 = vld [vmem:[%s11 + $0x30] sm:$0xff]
        %v1525 = vld [vmem:[%s11 + $0x38] sm:$0xff]
        %v1526 = vld [vmem:[%s11 + $0x40] sm:$0xff]
        %v1527 = vld [vmem:[%s11 + $0x48] sm:$0xff]
        %v1528 = vld [vmem:[%s11 + $0x50] sm:$0xff]
        %v1529 = vld [vmem:[%s11 + $0x58] sm:$0xff]
        %v1530 = vld [vmem:[%s11 + $0x60] sm:$0xff]
        %v1531 = vld [vmem:[%s11 + $0x68] sm:$0xff]
        %v1532 = vld [vmem:[%s11 + $0x70] sm:$0xff]
        %v1533 = vld [vmem:[%s11 + $0x78] sm:$0xff]
        %v1534 = vld [vmem:[%s11 + $0x80] sm:$0xff]
        %v1535 = vld [vmem:[%s11 + $0x88] sm:$0xff]
        %v1536 = vld [vmem:[%s11 + $0x90] sm:$0xff]
        %v1537 = vld [vmem:[%s11 + $0x98] sm:$0xff]
        %v1538 = vld [vmem:[%s11 + $0xa0] sm:$0xff]
        %v1539 = vld [vmem:[%s11 + $0xa8] sm:$0xff]
        %v1540 = vld [vmem:[%s11 + $0xb0] sm:$0xff]
        %v1541 = vld [vmem:[%s11 + $0xb8] sm:$0xff]
        %v1542 = vld [vmem:[%s11 + $0xc0] sm:$0xff]
        %v1543 = vld [vmem:[%s11 + $0xc8] sm:$0xff]
        %v1544 = vld [vmem:[%s11 + $0xd0] sm:$0xff]
        %v1545 = vld [vmem:[%s11 + $0xd8] sm:$0xff]
        %v1546 = vld [vmem:[%s11 + $0xe0] sm:$0xff]
        %v1547 = vld [vmem:[%s11 + $0xe8] sm:$0xff]
        %v1548 = vld [vmem:[%s11 + $0xf0] sm:$0xff]
        %v1549 = vld [vmem:[%s11 + $0xf8] sm:$0xff]
        %v1550 = vld [vmem:[%s12] sm:$0x3]
        %v1552 = vlaneseq
        %v1553 = vshrl.u32 %v1552, 7
        %v1554 = vsub.s32 0, %v1553
        %v1555 = vrot.slane %v1550, %v1554
        %v1556 = vlaneseq
        %v1557 = vshrl.u32 %v1556, 7
        %v1558 = vsub.s32 1, %v1557
        %v1559 = vrot.slane %v1550, %v1558
        %v1594 = vunpack.c.l.b16 %v1518
        %v1595 = vunpack.c.h.b16 %v1518
        %v1596 = vunpack.c.l.b16 %v1519
        %v1597 = vunpack.c.h.b16 %v1519
        %v1598 = vunpack.c.l.b16 %v1520
        %v1599 = vunpack.c.h.b16 %v1520
        %v1600 = vunpack.c.l.b16 %v1521
        %v1601 = vunpack.c.h.b16 %v1521
        %v1602 = vunpack.c.l.b16 %v1522
        %v1603 = vunpack.c.h.b16 %v1522
        %v1604 = vunpack.c.l.b16 %v1523
        %v1605 = vunpack.c.h.b16 %v1523
        %v1606 = vunpack.c.l.b16 %v1524
        %v1607 = vunpack.c.h.b16 %v1524
        %v1608 = vunpack.c.l.b16 %v1525
        %v1609 = vunpack.c.h.b16 %v1525
        %v1610 = vunpack.c.l.b16 %v1526
        %v1611 = vunpack.c.h.b16 %v1526
        %v1612 = vunpack.c.l.b16 %v1527
        %v1613 = vunpack.c.h.b16 %v1527
        %v1614 = vunpack.c.l.b16 %v1528
        %v1615 = vunpack.c.h.b16 %v1528
        %v1616 = vunpack.c.l.b16 %v1529
        %v1617 = vunpack.c.h.b16 %v1529
        %v1618 = vunpack.c.l.b16 %v1530
        %v1619 = vunpack.c.h.b16 %v1530
        %v1620 = vunpack.c.l.b16 %v1531
        %v1621 = vunpack.c.h.b16 %v1531
        %v1622 = vunpack.c.l.b16 %v1532
        %v1623 = vunpack.c.h.b16 %v1532
        %v1624 = vunpack.c.l.b16 %v1533
        %v1625 = vunpack.c.h.b16 %v1533
        %v1626 = vunpack.c.l.b16 %v1534
        %v1627 = vunpack.c.h.b16 %v1534
        %v1628 = vunpack.c.l.b16 %v1535
        %v1629 = vunpack.c.h.b16 %v1535
        %v1630 = vunpack.c.l.b16 %v1536
        %v1631 = vunpack.c.h.b16 %v1536
        %v1632 = vunpack.c.l.b16 %v1537
        %v1633 = vunpack.c.h.b16 %v1537
        %v1634 = vunpack.c.l.b16 %v1538
        %v1635 = vunpack.c.h.b16 %v1538
        %v1636 = vunpack.c.l.b16 %v1539
        %v1637 = vunpack.c.h.b16 %v1539
        %v1638 = vunpack.c.l.b16 %v1540
        %v1639 = vunpack.c.h.b16 %v1540
        %v1640 = vunpack.c.l.b16 %v1541
        %v1641 = vunpack.c.h.b16 %v1541
        %v1642 = vunpack.c.l.b16 %v1542
        %v1643 = vunpack.c.h.b16 %v1542
        %v1644 = vunpack.c.l.b16 %v1543
        %v1645 = vunpack.c.h.b16 %v1543
        %v1646 = vunpack.c.l.b16 %v1544
        %v1647 = vunpack.c.h.b16 %v1544
        %v1648 = vunpack.c.l.b16 %v1545
        %v1649 = vunpack.c.h.b16 %v1545
        %v1650 = vunpack.c.l.b16 %v1546
        %v1651 = vunpack.c.h.b16 %v1546
        %v1652 = vunpack.c.l.b16 %v1547
        %v1653 = vunpack.c.h.b16 %v1547
        %v1654 = vunpack.c.l.b16 %v1548
        %v1655 = vunpack.c.h.b16 %v1548
        %v1656 = vunpack.c.l.b16 %v1549
        %v1657 = vunpack.c.h.b16 %v1549
        %v1658 = vpack.c.b16 %v1596, %v1594
        %v1659 = vpack.c.b16 %v1597, %v1595
        %v1660 = vpack.c.b16 %v1600, %v1598
        %v1661 = vpack.c.b16 %v1601, %v1599
        %v1662 = vpack.c.b16 %v1604, %v1602
        %v1663 = vpack.c.b16 %v1605, %v1603
        %v1664 = vpack.c.b16 %v1608, %v1606
        %v1665 = vpack.c.b16 %v1609, %v1607
        %v1666 = vpack.c.b16 %v1612, %v1610
        %v1667 = vpack.c.b16 %v1613, %v1611
        %v1668 = vpack.c.b16 %v1616, %v1614
        %v1669 = vpack.c.b16 %v1617, %v1615
        %v1670 = vpack.c.b16 %v1620, %v1618
        %v1671 = vpack.c.b16 %v1621, %v1619
        %v1672 = vpack.c.b16 %v1624, %v1622
        %v1673 = vpack.c.b16 %v1625, %v1623
        %v1674 = vpack.c.b16 %v1628, %v1626
        %v1675 = vpack.c.b16 %v1629, %v1627
        %v1676 = vpack.c.b16 %v1632, %v1630
        %v1677 = vpack.c.b16 %v1633, %v1631
        %v1678 = vpack.c.b16 %v1636, %v1634
        %v1679 = vpack.c.b16 %v1637, %v1635
        %v1680 = vpack.c.b16 %v1640, %v1638
        %v1681 = vpack.c.b16 %v1641, %v1639
        %v1682 = vpack.c.b16 %v1644, %v1642
        %v1683 = vpack.c.b16 %v1645, %v1643
        %v1684 = vpack.c.b16 %v1648, %v1646
        %v1685 = vpack.c.b16 %v1649, %v1647
        %v1686 = vpack.c.b16 %v1652, %v1650
        %v1687 = vpack.c.b16 %v1653, %v1651
        %v1688 = vpack.c.b16 %v1656, %v1654
        %v1689 = vpack.c.b16 %v1657, %v1655
        %1722 = vmatprep.subr.bf16.mxu0 %v1673
        %1723 = vmatpush1.bf16.msra.mxu0 %v1672
        %1724 = vmatprep.subr.bf16.mxu0 %v1671
        %1725 = vmatpush1.bf16.msra.mxu0 %v1670
        %1726 = vmatprep.subr.bf16.mxu0 %v1669
        %1727 = vmatpush1.bf16.msra.mxu0 %v1668
        %1728 = vmatprep.subr.bf16.mxu0 %v1667
        %1729 = vmatpush1.bf16.msra.mxu0 %v1666
        %1730 = vmatprep.subr.bf16.mxu0 %v1665
        %1731 = vmatpush1.bf16.msra.mxu0 %v1664
        %1732 = vmatprep.subr.bf16.mxu0 %v1663
        %1733 = vmatpush1.bf16.msra.mxu0 %v1662
        %1734 = vmatprep.subr.bf16.mxu0 %v1661
        %1735 = vmatpush1.bf16.msra.mxu0 %v1660
        %1736 = vmatprep.subr.bf16.mxu0 %v1659
        %1737 = vmatpush1.bf16.msra.mxu0 %v1658
        %1738 = vmatprep.subr.bf16.mxu0 %v1689
        %1739 = vmatpush2.bf16.msra.mxu0 %v1688
        %1740 = vmatprep.subr.bf16.mxu0 %v1687
        %1741 = vmatpush2.bf16.msra.mxu0 %v1686
        %1742 = vmatprep.subr.bf16.mxu0 %v1685
        %1743 = vmatpush2.bf16.msra.mxu0 %v1684
        %1744 = vmatprep.subr.bf16.mxu0 %v1683
        %1745 = vmatpush2.bf16.msra.mxu0 %v1682
        %1746 = vmatprep.subr.bf16.mxu0 %v1681
        %1747 = vmatpush2.bf16.msra.mxu0 %v1680
        %1748 = vmatprep.subr.bf16.mxu0 %v1679
        %1749 = vmatpush2.bf16.msra.mxu0 %v1678
        %1750 = vmatprep.subr.bf16.mxu0 %v1677
        %1751 = vmatpush2.bf16.msra.mxu0 %v1676
        %1752 = vmatprep.subr.bf16.mxu0 %v1675
        %1753 = vmatpush2.bf16.msra.mxu0 %v1674
        %1754 = vmatprep.mubr.bf16.mxu0 %v1517
        %1755 = vmatmul.mubr.bf16.gmra.mxu0 %v1516
        %v1756 = vpop.f32.mrf.mxu0
        %v1757 = vadd.f32 %v1555, %v1756
        %v1758 = vpop.f32.mrf.mxu0
        %v1759 = vadd.f32 %v1559, %v1758
        %v1760 = vpop.f32.mrf.mxu0
        %v1761 = vadd.f32 %v1555, %v1760
        %v1762 = vpop.f32.mrf.mxu0
        %v1763 = vadd.f32 %v1559, %v1762
        %1764 = vdwg.mxu0
        %v1765 = vmax.f32 %v1757, 0.0
        %v1766 = vmax.f32 %v1759, 0.0
        %v1767 = vmax.f32 %v1761, 0.0
        %v1768 = vmax.f32 %v1763, 0.0
        %v1769 = vpack.c.bf16 %v1767, %v1765
        %v1770 = vpack.c.bf16 %v1768, %v1766
        %v1771 = vld [vmem:[#allocation4] sm:$0xff]
        %v1772 = vld [vmem:[#allocation4 + $0x8] sm:$0xff]
        %v1773 = vld [vmem:[#allocation4 + $0x10] sm:$0xff]
        %v1774 = vld [vmem:[#allocation4 + $0x18] sm:$0xff]
        %v1775 = vld [vmem:[#allocation4 + $0x20] sm:$0xff]
        %v1776 = vld [vmem:[#allocation4 + $0x28] sm:$0xff]
        %v1777 = vld [vmem:[#allocation4 + $0x30] sm:$0xff]
        %v1778 = vld [vmem:[#allocation4 + $0x38] sm:$0xff]
        %v1779 = vld [vmem:[#allocation4 + $0x40] sm:$0xff]
        %v1780 = vld [vmem:[#allocation4 + $0x48] sm:$0xff]
        %v1781 = vld [vmem:[#allocation4 + $0x50] sm:$0xff]
        %v1782 = vld [vmem:[#allocation4 + $0x58] sm:$0xff]
        %v1783 = vld [vmem:[#allocation4 + $0x60] sm:$0xff]
        %v1784 = vld [vmem:[#allocation4 + $0x68] sm:$0xff]
        %v1785 = vld [vmem:[#allocation4 + $0x70] sm:$0xff]
        %v1786 = vld [vmem:[#allocation4 + $0x78] sm:$0xff]
        %v1787 = vld [vmem:[#allocation4 + $0x80] sm:$0xff]
        %v1788 = vld [vmem:[#allocation4 + $0x88] sm:$0xff]
        %v1789 = vld [vmem:[#allocation4 + $0x90] sm:$0xff]
        %v1790 = vld [vmem:[#allocation4 + $0x98] sm:$0xff]
        %v1791 = vld [vmem:[#allocation4 + $0xa0] sm:$0xff]
        %v1792 = vld [vmem:[#allocation4 + $0xa8] sm:$0xff]
        %v1793 = vld [vmem:[#allocation4 + $0xb0] sm:$0xff]
        %v1794 = vld [vmem:[#allocation4 + $0xb8] sm:$0xff]
        %v1795 = vld [vmem:[#allocation4 + $0xc0] sm:$0xff]
        %v1796 = vld [vmem:[#allocation4 + $0xc8] sm:$0xff]
        %v1797 = vld [vmem:[#allocation4 + $0xd0] sm:$0xff]
        %v1798 = vld [vmem:[#allocation4 + $0xd8] sm:$0xff]
        %v1799 = vld [vmem:[#allocation4 + $0xe0] sm:$0xff]
        %v1800 = vld [vmem:[#allocation4 + $0xe8] sm:$0xff]
        %v1801 = vld [vmem:[#allocation4 + $0xf0] sm:$0xff]
        %v1802 = vld [vmem:[#allocation4 + $0xf8] sm:$0xff]
        %v1803 = vld [vmem:[%s14] sm:$0x3]
        %v1805 = vlaneseq
        %v1806 = vshrl.u32 %v1805, 7
        %v1807 = vsub.s32 0, %v1806
        %v1808 = vrot.slane %v1803, %v1807
        %v1809 = vlaneseq
        %v1810 = vshrl.u32 %v1809, 7
        %v1811 = vsub.s32 1, %v1810
        %v1812 = vrot.slane %v1803, %v1811
        %v1847 = vunpack.c.l.b16 %v1771
        %v1848 = vunpack.c.h.b16 %v1771
        %v1849 = vunpack.c.l.b16 %v1772
        %v1850 = vunpack.c.h.b16 %v1772
        %v1851 = vunpack.c.l.b16 %v1773
        %v1852 = vunpack.c.h.b16 %v1773
        %v1853 = vunpack.c.l.b16 %v1774
        %v1854 = vunpack.c.h.b16 %v1774
        %v1855 = vunpack.c.l.b16 %v1775
        %v1856 = vunpack.c.h.b16 %v1775
        %v1857 = vunpack.c.l.b16 %v1776
        %v1858 = vunpack.c.h.b16 %v1776
        %v1859 = vunpack.c.l.b16 %v1777
        %v1860 = vunpack.c.h.b16 %v1777
        %v1861 = vunpack.c.l.b16 %v1778
        %v1862 = vunpack.c.h.b16 %v1778
        %v1863 = vunpack.c.l.b16 %v1779
        %v1864 = vunpack.c.h.b16 %v1779
        %v1865 = vunpack.c.l.b16 %v1780
        %v1866 = vunpack.c.h.b16 %v1780
        %v1867 = vunpack.c.l.b16 %v1781
        %v1868 = vunpack.c.h.b16 %v1781
        %v1869 = vunpack.c.l.b16 %v1782
        %v1870 = vunpack.c.h.b16 %v1782
        %v1871 = vunpack.c.l.b16 %v1783
        %v1872 = vunpack.c.h.b16 %v1783
        %v1873 = vunpack.c.l.b16 %v1784
        %v1874 = vunpack.c.h.b16 %v1784
        %v1875 = vunpack.c.l.b16 %v1785
        %v1876 = vunpack.c.h.b16 %v1785
        %v1877 = vunpack.c.l.b16 %v1786
        %v1878 = vunpack.c.h.b16 %v1786
        %v1879 = vunpack.c.l.b16 %v1787
        %v1880 = vunpack.c.h.b16 %v1787
        %v1881 = vunpack.c.l.b16 %v1788
        %v1882 = vunpack.c.h.b16 %v1788
        %v1883 = vunpack.c.l.b16 %v1789
        %v1884 = vunpack.c.h.b16 %v1789
        %v1885 = vunpack.c.l.b16 %v1790
        %v1886 = vunpack.c.h.b16 %v1790
        %v1887 = vunpack.c.l.b16 %v1791
        %v1888 = vunpack.c.h.b16 %v1791
        %v1889 = vunpack.c.l.b16 %v1792
        %v1890 = vunpack.c.h.b16 %v1792
        %v1891 = vunpack.c.l.b16 %v1793
        %v1892 = vunpack.c.h.b16 %v1793
        %v1893 = vunpack.c.l.b16 %v1794
        %v1894 = vunpack.c.h.b16 %v1794
        %v1895 = vunpack.c.l.b16 %v1795
        %v1896 = vunpack.c.h.b16 %v1795
        %v1897 = vunpack.c.l.b16 %v1796
        %v1898 = vunpack.c.h.b16 %v1796
        %v1899 = vunpack.c.l.b16 %v1797
        %v1900 = vunpack.c.h.b16 %v1797
        %v1901 = vunpack.c.l.b16 %v1798
        %v1902 = vunpack.c.h.b16 %v1798
        %v1903 = vunpack.c.l.b16 %v1799
        %v1904 = vunpack.c.h.b16 %v1799
        %v1905 = vunpack.c.l.b16 %v1800
        %v1906 = vunpack.c.h.b16 %v1800
        %v1907 = vunpack.c.l.b16 %v1801
        %v1908 = vunpack.c.h.b16 %v1801
        %v1909 = vunpack.c.l.b16 %v1802
        %v1910 = vunpack.c.h.b16 %v1802
        %v1911 = vpack.c.b16 %v1849, %v1847
        %v1912 = vpack.c.b16 %v1850, %v1848
        %v1913 = vpack.c.b16 %v1853, %v1851
        %v1914 = vpack.c.b16 %v1854, %v1852
        %v1915 = vpack.c.b16 %v1857, %v1855
        %v1916 = vpack.c.b16 %v1858, %v1856
        %v1917 = vpack.c.b16 %v1861, %v1859
        %v1918 = vpack.c.b16 %v1862, %v1860
        %v1919 = vpack.c.b16 %v1865, %v1863
        %v1920 = vpack.c.b16 %v1866, %v1864
        %v1921 = vpack.c.b16 %v1869, %v1867
        %v1922 = vpack.c.b16 %v1870, %v1868
        %v1923 = vpack.c.b16 %v1873, %v1871
        %v1924 = vpack.c.b16 %v1874, %v1872
        %v1925 = vpack.c.b16 %v1877, %v1875
        %v1926 = vpack.c.b16 %v1878, %v1876
        %v1927 = vpack.c.b16 %v1881, %v1879
        %v1928 = vpack.c.b16 %v1882, %v1880
        %v1929 = vpack.c.b16 %v1885, %v1883
        %v1930 = vpack.c.b16 %v1886, %v1884
        %v1931 = vpack.c.b16 %v1889, %v1887
        %v1932 = vpack.c.b16 %v1890, %v1888
        %v1933 = vpack.c.b16 %v1893, %v1891
        %v1934 = vpack.c.b16 %v1894, %v1892
        %v1935 = vpack.c.b16 %v1897, %v1895
        %v1936 = vpack.c.b16 %v1898, %v1896
        %v1937 = vpack.c.b16 %v1901, %v1899
        %v1938 = vpack.c.b16 %v1902, %v1900
        %v1939 = vpack.c.b16 %v1905, %v1903
        %v1940 = vpack.c.b16 %v1906, %v1904
        %v1941 = vpack.c.b16 %v1909, %v1907
        %v1942 = vpack.c.b16 %v1910, %v1908
        %1975 = vmatprep.subr.bf16.mxu0 %v1926
        %1976 = vmatpush1.bf16.msra.mxu0 %v1925
        %1977 = vmatprep.subr.bf16.mxu0 %v1924
        %1978 = vmatpush1.bf16.msra.mxu0 %v1923
        %1979 = vmatprep.subr.bf16.mxu0 %v1922
        %1980 = vmatpush1.bf16.msra.mxu0 %v1921
        %1981 = vmatprep.subr.bf16.mxu0 %v1920
        %1982 = vmatpush1.bf16.msra.mxu0 %v1919
        %1983 = vmatprep.subr.bf16.mxu0 %v1918
        %1984 = vmatpush1.bf16.msra.mxu0 %v1917
        %1985 = vmatprep.subr.bf16.mxu0 %v1916
        %1986 = vmatpush1.bf16.msra.mxu0 %v1915
        %1987 = vmatprep.subr.bf16.mxu0 %v1914
        %1988 = vmatpush1.bf16.msra.mxu0 %v1913
        %1989 = vmatprep.subr.bf16.mxu0 %v1912
        %1990 = vmatpush1.bf16.msra.mxu0 %v1911
        %1991 = vmatprep.subr.bf16.mxu0 %v1942
        %1992 = vmatpush2.bf16.msra.mxu0 %v1941
        %1993 = vmatprep.subr.bf16.mxu0 %v1940
        %1994 = vmatpush2.bf16.msra.mxu0 %v1939
        %1995 = vmatprep.subr.bf16.mxu0 %v1938
        %1996 = vmatpush2.bf16.msra.mxu0 %v1937
        %1997 = vmatprep.subr.bf16.mxu0 %v1936
        %1998 = vmatpush2.bf16.msra.mxu0 %v1935
        %1999 = vmatprep.subr.bf16.mxu0 %v1934
        %2000 = vmatpush2.bf16.msra.mxu0 %v1933
        %2001 = vmatprep.subr.bf16.mxu0 %v1932
        %2002 = vmatpush2.bf16.msra.mxu0 %v1931
        %2003 = vmatprep.subr.bf16.mxu0 %v1930
        %2004 = vmatpush2.bf16.msra.mxu0 %v1929
        %2005 = vmatprep.subr.bf16.mxu0 %v1928
        %2006 = vmatpush2.bf16.msra.mxu0 %v1927
        %2007 = vmatprep.mubr.bf16.mxu0 %v1770
        %2008 = vmatmul.mubr.bf16.gmra.mxu0 %v1769
        %v2009 = vpop.f32.mrf.mxu0
        %v2010 = vadd.f32 %v1808, %v2009
        %v2011 = vpop.f32.mrf.mxu0
        %v2012 = vadd.f32 %v1812, %v2011
        %v2013 = vpop.f32.mrf.mxu0
        %v2014 = vadd.f32 %v1808, %v2013
        %v2015 = vpop.f32.mrf.mxu0
        %v2016 = vadd.f32 %v1812, %v2015
        %2017 = vdwg.mxu0
        %v2018 = vmax.f32 %v2010, 0.0
        %v2019 = vmax.f32 %v2012, 0.0
        %v2020 = vmax.f32 %v2014, 0.0
        %v2021 = vmax.f32 %v2016, 0.0
        %v2022 = vpack.c.bf16 %v2020, %v2018
        %v2023 = vpack.c.bf16 %v2021, %v2019
        %v2024 = vld [vmem:[%s15] sm:$0xf]
        %v2025 = vld [vmem:[%s15 + $0x4] sm:$0xf]
        %v2026 = vld [vmem:[%s15 + $0x8] sm:$0xf]
        %v2027 = vld [vmem:[%s15 + $0xc] sm:$0xf]
        %v2028 = vld [vmem:[%s15 + $0x10] sm:$0xf]
        %v2029 = vld [vmem:[%s15 + $0x14] sm:$0xf]
        %v2030 = vld [vmem:[%s15 + $0x18] sm:$0xf]
        %v2031 = vld [vmem:[%s15 + $0x1c] sm:$0xf]
        %v2032 = vld [vmem:[%s15 + $0x20] sm:$0xf]
        %v2033 = vld [vmem:[%s15 + $0x24] sm:$0xf]
        %v2034 = vld [vmem:[%s15 + $0x28] sm:$0xf]
        %v2035 = vld [vmem:[%s15 + $0x2c] sm:$0xf]
        %v2036 = vld [vmem:[%s15 + $0x30] sm:$0xf]
        %v2037 = vld [vmem:[%s15 + $0x34] sm:$0xf]
        %v2038 = vld [vmem:[%s15 + $0x38] sm:$0xf]
        %v2039 = vld [vmem:[%s15 + $0x3c] sm:$0xf]
        %v2040 = vld [vmem:[%s15 + $0x40] sm:$0xf]
        %v2041 = vld [vmem:[%s15 + $0x44] sm:$0xf]
        %v2042 = vld [vmem:[%s15 + $0x48] sm:$0xf]
        %v2043 = vld [vmem:[%s15 + $0x4c] sm:$0xf]
        %v2044 = vld [vmem:[%s15 + $0x50] sm:$0xf]
        %v2045 = vld [vmem:[%s15 + $0x54] sm:$0xf]
        %v2046 = vld [vmem:[%s15 + $0x58] sm:$0xf]
        %v2047 = vld [vmem:[%s15 + $0x5c] sm:$0xf]
        %v2048 = vld [vmem:[%s15 + $0x60] sm:$0xf]
        %v2049 = vld [vmem:[%s15 + $0x64] sm:$0xf]
        %v2050 = vld [vmem:[%s15 + $0x68] sm:$0xf]
        %v2051 = vld [vmem:[%s15 + $0x6c] sm:$0xf]
        %v2052 = vld [vmem:[%s15 + $0x70] sm:$0xf]
        %v2053 = vld [vmem:[%s15 + $0x74] sm:$0xf]
        %v2054 = vld [vmem:[%s15 + $0x78] sm:$0xf]
        %v2055 = vld [vmem:[%s15 + $0x7c] sm:$0xf]
        %v2056 = vld [vmem:[%s16] sm:$0x1]
        %v2058 = vlaneseq
        %v2059 = vshrl.u32 %v2058, 7
        %v2060 = vsub.s32 0, %v2059
        %v2061 = vrot.slane %v2056, %v2060
        %v2095 = vunpack.c.l.b16 %v2024
        %v2096 = vunpack.c.l.b16 %v2025
        %v2097 = vunpack.c.l.b16 %v2026
        %v2098 = vunpack.c.l.b16 %v2027
        %v2099 = vunpack.c.l.b16 %v2028
        %v2100 = vunpack.c.l.b16 %v2029
        %v2101 = vunpack.c.l.b16 %v2030
        %v2102 = vunpack.c.l.b16 %v2031
        %v2103 = vunpack.c.l.b16 %v2032
        %v2104 = vunpack.c.l.b16 %v2033
        %v2105 = vunpack.c.l.b16 %v2034
        %v2106 = vunpack.c.l.b16 %v2035
        %v2107 = vunpack.c.l.b16 %v2036
        %v2108 = vunpack.c.l.b16 %v2037
        %v2109 = vunpack.c.l.b16 %v2038
        %v2110 = vunpack.c.l.b16 %v2039
        %v2111 = vunpack.c.l.b16 %v2040
        %v2112 = vunpack.c.l.b16 %v2041
        %v2113 = vunpack.c.l.b16 %v2042
        %v2114 = vunpack.c.l.b16 %v2043
        %v2115 = vunpack.c.l.b16 %v2044
        %v2116 = vunpack.c.l.b16 %v2045
        %v2117 = vunpack.c.l.b16 %v2046
        %v2118 = vunpack.c.l.b16 %v2047
        %v2119 = vunpack.c.l.b16 %v2048
        %v2120 = vunpack.c.l.b16 %v2049
        %v2121 = vunpack.c.l.b16 %v2050
        %v2122 = vunpack.c.l.b16 %v2051
        %v2123 = vunpack.c.l.b16 %v2052
        %v2124 = vunpack.c.l.b16 %v2053
        %v2125 = vunpack.c.l.b16 %v2054
        %v2126 = vunpack.c.l.b16 %v2055
        %v2127 = vpack.c.b16 %v2096, %v2095
        %v2128 = vpack.c.b16 %v2098, %v2097
        %v2129 = vpack.c.b16 %v2100, %v2099
        %v2130 = vpack.c.b16 %v2102, %v2101
        %v2131 = vpack.c.b16 %v2104, %v2103
        %v2132 = vpack.c.b16 %v2106, %v2105
        %v2133 = vpack.c.b16 %v2108, %v2107
        %v2134 = vpack.c.b16 %v2110, %v2109
        %v2135 = vpack.c.b16 %v2112, %v2111
        %v2136 = vpack.c.b16 %v2114, %v2113
        %v2137 = vpack.c.b16 %v2116, %v2115
        %v2138 = vpack.c.b16 %v2118, %v2117
        %v2139 = vpack.c.b16 %v2120, %v2119
        %v2140 = vpack.c.b16 %v2122, %v2121
        %v2141 = vpack.c.b16 %v2124, %v2123
        %v2142 = vpack.c.b16 %v2126, %v2125
        %2159 = vmatprep.subr.bf16.mxu0 0
        %2160 = vmatpush1.bf16.msra.mxu0 %v2134
        %2161 = vmatprep.subr.bf16.mxu0 0
        %2162 = vmatpush1.bf16.msra.mxu0 %v2133
        %2163 = vmatprep.subr.bf16.mxu0 0
        %2164 = vmatpush1.bf16.msra.mxu0 %v2132
        %2165 = vmatprep.subr.bf16.mxu0 0
        %2166 = vmatpush1.bf16.msra.mxu0 %v2131
        %2167 = vmatprep.subr.bf16.mxu0 0
        %2168 = vmatpush1.bf16.msra.mxu0 %v2130
        %2169 = vmatprep.subr.bf16.mxu0 0
        %2170 = vmatpush1.bf16.msra.mxu0 %v2129
        %2171 = vmatprep.subr.bf16.mxu0 0
        %2172 = vmatpush1.bf16.msra.mxu0 %v2128
        %2173 = vmatprep.subr.bf16.mxu0 0
        %2174 = vmatpush1.bf16.msra.mxu0 %v2127
        %2175 = vmatprep.subr.bf16.mxu0 0
        %2176 = vmatpush2.bf16.msra.mxu0 %v2142
        %2177 = vmatprep.subr.bf16.mxu0 0
        %2178 = vmatpush2.bf16.msra.mxu0 %v2141
        %2179 = vmatprep.subr.bf16.mxu0 0
        %2180 = vmatpush2.bf16.msra.mxu0 %v2140
        %2181 = vmatprep.subr.bf16.mxu0 0
        %2182 = vmatpush2.bf16.msra.mxu0 %v2139
        %2183 = vmatprep.subr.bf16.mxu0 0
        %2184 = vmatpush2.bf16.msra.mxu0 %v2138
        %2185 = vmatprep.subr.bf16.mxu0 0
        %2186 = vmatpush2.bf16.msra.mxu0 %v2137
        %2187 = vmatprep.subr.bf16.mxu0 0
        %2188 = vmatpush2.bf16.msra.mxu0 %v2136
        %2189 = vmatprep.subr.bf16.mxu0 0
        %2190 = vmatpush2.bf16.msra.mxu0 %v2135
        %2191 = vmatprep.mubr.bf16.mxu0 %v2023
        %2192 = vmatmul.mubr.bf16.gmra.mxu0 %v2022
        %v2193 = vpop.f32.mrf.mxu0
        %v2194 = vadd.f32 %v2061, %v2193
        %v2195 = vpop.f32.mrf.mxu0
        %v2196 = vpop.f32.mrf.mxu0
        %v2197 = vadd.f32 %v2061, %v2196
        %v2198 = vpop.f32.mrf.mxu0
        %2199 = vdwg.mxu0
        %2200 = vst.msk [vmem:[%s615] sm:$0xff] %vm691, %v2194
        %2201 = vst.msk [vmem:[%s615 + $0x8] sm:$0xff] %vm691, %v2197
        %s2202 = smul.u32 2, %s32
        %p2203 = scmp.lt.s32.totalorder %s2202, 7
        %s2204 = scalar_select %p2203, %s2202, 7
        %s2205 = smul.addr %s2204, 8
        %s2206 = scalar_lea.vmem %s17, %s2205
        %s2207 = smul.u32 2, %s32
        %p2208 = scmp.lt.s32.totalorder %s2207, 7
        %s2209 = scalar_select %p2208, %s2207, 7
        %s2210 = smul.addr %s2209, 8
        %s2211 = scalar_lea.vmem %s18, %s2210
        // Predicated region
        $region97: #{aeprob_forward.1} parent=87 // pred_check
          %p2212 = pneg %p412
        $region98: #{aeprob_forward.1} parent=87 // pred_check_branch
          %2214 = sbr.rel (%p2212) target = $region100
        $region99: #{aeprob_forward.1} parent=87 // pred_region
          %s2215 = smul.u32 2, %s32
        $region100: #{aeprob_forward.1} parent=87 // pred_fallthru
          _
        // Predicated region
        $region101: #{aeprob_forward.1} parent=87 // pred_check
          %p2216 = pneg %p438
        $region102: #{aeprob_forward.1} parent=87 // pred_check_branch
          %2218 = sbr.rel (%p2216) target = $region104
        $region103: #{aeprob_forward.1} parent=87 // pred_region
          %s2219 = smul.u32 2, %s32
        $region104: #{aeprob_forward.1} parent=87 // pred_fallthru
          _
      $region88: #{aeprob_forward.1} parent=5 // pred_fallthru
        _
      %p2220 = scmp.le.s32.totalorder 2, %s27
      // Predicated region
      $region105: #{aeprob_forward.1} parent=5 // pred_check
        %p2221 = pneg %p2220
      $region106: #{aeprob_forward.1} parent=5 // pred_check_branch
        %2223 = sbr.rel (%p2221) target = $region108
      $region107: #{aeprob_forward.1} parent=5 // pred_region
        %s2224 = ssub.s32 %s27, 2
        // Predicated region
        $region109: #{aeprob_forward.1} parent=107 // pred_check
          %p2225 = pneg %p418
        $region110: #{aeprob_forward.1} parent=107 // pred_check_branch
          %2227 = sbr.rel (%p2225) target = $region112
        $region111: #{aeprob_forward.1} parent=107 // pred_region
          %s2228 = smul.u32 2, %s33
          %p2229 = scmp.lt.s32.totalorder %s2228, 7
          %s2230 = scalar_select %p2229, %s2228, 7
          %s2231 = smul.addr %s2230, 8
          %s2232 = scalar_lea.vmem %s17, %s2231
        $region112: #{aeprob_forward.1} parent=107 // pred_fallthru
          _
        // Predicated region
        $region113: #{aeprob_forward.1} parent=107 // pred_check
          %p2233 = pneg %p444
        $region114: #{aeprob_forward.1} parent=107 // pred_check_branch
          %2235 = sbr.rel (%p2233) target = $region116
        $region115: #{aeprob_forward.1} parent=107 // pred_region
          %s2236 = smul.u32 2, %s33
          %p2237 = scmp.lt.s32.totalorder %s2236, 7
          %s2238 = scalar_select %p2237, %s2236, 7
          %s2239 = smul.addr %s2238, 8
          %s2240 = scalar_lea.vmem %s18, %s2239
        $region116: #{aeprob_forward.1} parent=107 // pred_fallthru
          _
      $region108: #{aeprob_forward.1} parent=5 // pred_fallthru
        _
    $region6: #{aeprob_forward.1} parent=1 // loop_footer
      %s31 = sadd.s32 1, %s27
    $region7: #{aeprob_forward.1} parent=1 // loop_footer_branch
      %26 = sbr.rel target = $region3
    $region8: #{aeprob_forward.1} parent=1 // loop_exit
      _
    %2241 = vsyncpa [#allocation3], 1
    %s2242 = scalar_lea.sflag [#allocation3], 1
    %2243 = vsyncpa %s2242, 1
    %2244 = vsyncpa [#allocation5], 1

</llo_original>
